<compile_context>
chip_gen: v5e
topology: v5e:2x2
jax: 0.10.0
libtpu: 0.0.40
codegen_flags: <defaults>
</compile_context>

<pallas_src>
import functools

import jax
import jax.numpy as jnp
from jax.experimental import pallas as pl
from jax.experimental.pallas import tpu as pltpu

P = 128                       # lane-padded channel width (all channel dims -> 128)
STEM_CH = 8
HEAD_CH = 32
BN_EPS = 1e-3

# Synthetic small EfficientNet config (same structure as the PyTorch module).
BLOCK0 = dict(input_filters=8, output_filters=8, expand_ratio=1, kernel_size=3,
              stride=1, se_ratio=0.25, id_skip=True)
BLOCK1 = dict(input_filters=8, output_filters=16, expand_ratio=6, kernel_size=3,
              stride=2, se_ratio=0.25, id_skip=True)

VMEM = pltpu.MemorySpace.VMEM

# Weight-slab row indices (order of init_params appends).
W_STEM, W_B0_SER, W_B0_SEE, W_B0_PROJ = 0, 1, 2, 3
W_B1_EXP, W_B1_SER, W_B1_SEE, W_B1_PROJ, W_HEAD = 4, 5, 6, 7, 8
N_W = 9
# Bias-slab row indices.
(B_STEM, B_B0_DW, B_B0_SER, B_B0_SEE, B_B0_PROJ,
 B_B1_EXP, B_B1_DW, B_B1_SER, B_B1_SEE, B_B1_PROJ, B_HEAD) = range(11)
N_BIAS = 11
B_SLAB_ROWS = 16              # padded to a full sublane tile


def _vspec():
    return pl.BlockSpec(memory_space=VMEM)


# ------------------------------ fused Pallas kernel -------------------------- #

def _effnet_fused_kernel(x_ref, w_ref, dw_ref, b_ref, o_ref, *, b, h, w):
    """Stem -> MBConv0 -> MBConv1 -> head -> GAP, entirely in VMEM/vregs."""
    f32 = jnp.float32

    def dot_w(x, wi):
        # MXU matmul: bf16 operands, f32 accumulation.
        return jnp.dot(x.astype(jnp.bfloat16), w_ref[wi],
                       preferred_element_type=f32)

    def sigmoid(y):
        # exp and the reciprocal both go to the EUP slot (no VALU divide).
        return pl.reciprocal(1.0 + jnp.exp(-y), approx=True)

    def swish(y):
        return y * sigmoid(y)

    def depthwise3x3(x4, dw):
        """Dense 3x3 / stride-1 SAME depthwise conv on (b, h, w, P) -> same shape.

        Column (w) padding/shift via one sublane concat + 3 column views; row (h)
        padding/shift via leading-axis concats/slices (free).  No scratch refs,
        no full-buffer zero passes.
        # TODO(synk): block-0 runs on 128 padded lanes with 8 real channels; for
        # real shapes fold the 9 taps into one block-diagonal MXU matmul.
        """
        zcol = jnp.zeros((b, h, 1, P), f32)
        zrow = jnp.zeros((b, 1, w, P), f32)
        padw = jnp.concatenate([zcol, x4, zcol], axis=2)        # (b, h, w+2, P)
        acc = jnp.zeros((b, h, w, P), f32)
        for dx in range(3):
            colv = padw[:, :, dx:dx + w, :]                     # column-shifted view
            padh = jnp.concatenate([zrow, colv, zrow], axis=1)  # (b, h+2, w, P)
            for dy in range(3):
                t = dy * 3 + dx
                acc = acc + padh[:, dy:dy + h, :, :] * dw[t:t + 1, :]
        return acc

    # ---- stem conv (im2col matmul, folded BN) + swish ----
    s0 = swish(dot_w(x_ref[...], W_STEM) + b_ref[B_STEM])       # (b*h*w, P)
    s0_4 = s0.reshape(b, h, w, P)                               # tile-stacking reshape

    # ---- MBConv block 0 (expand_ratio=1: no expand conv) ----
    y0 = swish(depthwise3x3(s0_4, dw_ref[0]) + b_ref[B_B0_DW])
    pooled0 = jnp.mean(y0, axis=(1, 2))                         # SE squeeze (b, P)
    sq0 = swish(dot_w(pooled0, W_B0_SER) + b_ref[B_B0_SER])
    gate0 = sigmoid(dot_w(sq0, W_B0_SEE) + b_ref[B_B0_SEE])
    xg0 = y0 * gate0[:, None, None, :]
    pr0 = dot_w(xg0.reshape(b * h * w, P), W_B0_PROJ) + b_ref[B_B0_PROJ]
    # id_skip, stride 1, in == out filters; drop_connect is identity at inference.
    r0 = pr0 + s0

    # ---- MBConv block 1 (expand 6x, depthwise 3x3 stride 2, no residual) ----
    e1 = swish(dot_w(r0, W_B1_EXP) + b_ref[B_B1_EXP])           # (b*h*w, P)
    # For even h, w: stride-2 SAME depthwise == dense stride-1 SAME depthwise
    # sampled at the odd (row, col) positions.  Keep the dense layout and mask
    # the (h//2)*(w//2) valid samples instead of gathering (no strided access).
    y1 = swish(depthwise3x3(e1.reshape(b, h, w, P), dw_ref[1]) + b_ref[B_B1_DW])
    ri = jax.lax.broadcasted_iota(jnp.int32, (b, h, w, P), 1)
    ci = jax.lax.broadcasted_iota(jnp.int32, (b, h, w, P), 2)
    valid = ((ri % 2) == 1) & ((ci % 2) == 1)
    inv_n = 1.0 / float((h // 2) * (w // 2))
    y1v = jnp.where(valid, y1, 0.0)
    pooled1 = jnp.sum(y1v, axis=(1, 2)) * inv_n                 # SE pool over 4x4 output
    sq1 = swish(dot_w(pooled1, W_B1_SER) + b_ref[B_B1_SER])
    gate1 = sigmoid(dot_w(sq1, W_B1_SEE) + b_ref[B_B1_SEE])
    xg1 = y1v * gate1[:, None, None, :]
    pr1 = dot_w(xg1.reshape(b * h * w, P), W_B1_PROJ) + b_ref[B_B1_PROJ]

    # ---- head 1x1 conv (folded BN) + swish + global average pool ----
    hd = swish(dot_w(pr1, W_HEAD) + b_ref[B_HEAD])              # (b*h*w, P)
    hdv = jnp.where(valid, hd.reshape(b, h, w, P), 0.0)
    o_ref[...] = jnp.sum(hdv, axis=(1, 2)) * inv_n              # (b, P)


# --------------------------- wrapper-side layout plumbing -------------------- #

def _same_pad(h, w, k, s):
    """TensorFlow-style SAME padding (identical to Conv2dStaticSamePadding)."""
    ho = -(-h // s)
    wo = -(-w // s)
    ph = max((ho - 1) * s + k - h, 0)
    pw = max((wo - 1) * s + k - w, 0)
    return (ph // 2, ph - ph // 2), (pw // 2, pw - pw // 2), ho, wo


def _stem_im2col(x, k=3, s=2):
    """SAME im2col for the stem conv, zero-padded to P lane columns, cast to bf16.

    TODO(synk): for full-resolution inputs move the im2col into the kernel
    (tap-wise MACs) instead of wrapper-side slices.
    """
    b, h, w, c = x.shape
    (pt, pb), (pl_, pr), ho, wo = _same_pad(h, w, k, s)
    xp = jnp.pad(x, ((0, 0), (pt, pb), (pl_, pr), (0, 0)))
    cols = []
    for dy in range(k):
        for dx in range(k):
            cols.append(xp[:, dy:dy + s * (ho - 1) + 1:s,
                           dx:dx + s * (wo - 1) + 1:s, :])
    patches = jnp.concatenate(cols, axis=-1).reshape(b * ho * wo, k * k * c)
    patches = jnp.pad(patches, ((0, 0), (0, P - k * k * c)))
    return patches.astype(jnp.bfloat16), ho, wo


# ------------------------------ parameter preparation ------------------------ #

def _bn_affine(key, c):
    """Fold BatchNorm (gamma, beta, running_mean, running_var) to scale/shift."""
    k1, k2, k3, k4 = jax.random.split(key, 4)
    gamma = 1.0 + 0.1 * jax.random.normal(k1, (c,), jnp.float32)
    beta = 0.1 * jax.random.normal(k2, (c,), jnp.float32)
    mean = 0.1 * jax.random.normal(k3, (c,), jnp.float32)
    var = jnp.abs(1.0 + 0.1 * jax.random.normal(k4, (c,), jnp.float32))
    scale = gamma / jnp.sqrt(var + BN_EPS)
    shift = beta - mean * scale
    return scale, shift


def _pad_mat(w):          # (Cin, Cout) -> (P, P), zero padded
    return jnp.zeros((P, P), jnp.float32).at[:w.shape[0], :w.shape[1]].set(w)


def _pad_dw(w):           # (9, C) -> (9, P)
    return jnp.zeros((9, P), jnp.float32).at[:, :w.shape[1]].set(w)


def _pad_vec(v):          # (C,) -> (P,)
    return jnp.zeros((P,), jnp.float32).at[:v.shape[0]].set(v)


def init_params(key):
    ks = iter(jax.random.split(key, 64))

    def rnd(shape):
        return 0.1 * jax.random.normal(next(ks), shape, jnp.float32)

    w_list = []                       # matmul weights, each (P, P) f32
    dw_list = []                      # depthwise weights, each (9, P) f32
    b_rows = [None] * N_BIAS          # bias / folded-BN shift rows, each (P,)

    # Stem: 3x3 s2 conv, 27 -> STEM_CH, no bias; BN scale folded into the weight.
    wm = rnd((3 * 3 * 3, STEM_CH)); sc, sh = _bn_affine(next(ks), STEM_CH)
    w_list.append(_pad_mat(wm * sc[None, :])); b_rows[B_STEM] = _pad_vec(sh)

    # Block 0: expand_ratio 1 (no expand), dw 3x3 s1, SE(8->2->8), proj 8->8.
    c0 = BLOCK0["input_filters"] * BLOCK0["expand_ratio"]
    sq0 = max(1, int(BLOCK0["input_filters"] * BLOCK0["se_ratio"]))
    wm = rnd((9, c0)); sc, sh = _bn_affine(next(ks), c0)
    dw_list.append(_pad_dw(wm * sc[None, :])); b_rows[B_B0_DW] = _pad_vec(sh)
    w_list.append(_pad_mat(rnd((c0, sq0)))); b_rows[B_B0_SER] = _pad_vec(rnd((sq0,)))
    w_list.append(_pad_mat(rnd((sq0, c0)))); b_rows[B_B0_SEE] = _pad_vec(rnd((c0,)))
    wm = rnd((c0, BLOCK0["output_filters"]))
    sc, sh = _bn_affine(next(ks), BLOCK0["output_filters"])
    w_list.append(_pad_mat(wm * sc[None, :])); b_rows[B_B0_PROJ] = _pad_vec(sh)

    # Block 1: expand 8->48, dw 3x3 s2, SE(48->2->48), proj 48->16.
    c1 = BLOCK1["input_filters"] * BLOCK1["expand_ratio"]
    sq1 = max(1, int(BLOCK1["input_filters"] * BLOCK1["se_ratio"]))
    wm = rnd((BLOCK1["input_filters"], c1)); sc, sh = _bn_affine(next(ks), c1)
    w_list.append(_pad_mat(wm * sc[None, :])); b_rows[B_B1_EXP] = _pad_vec(sh)
    wm = rnd((9, c1)); sc, sh = _bn_affine(next(ks), c1)
    dw_list.append(_pad_dw(wm * sc[None, :])); b_rows[B_B1_DW] = _pad_vec(sh)
    w_list.append(_pad_mat(rnd((c1, sq1)))); b_rows[B_B1_SER] = _pad_vec(rnd((sq1,)))
    w_list.append(_pad_mat(rnd((sq1, c1)))); b_rows[B_B1_SEE] = _pad_vec(rnd((c1,)))
    wm = rnd((c1, BLOCK1["output_filters"]))
    sc, sh = _bn_affine(next(ks), BLOCK1["output_filters"])
    w_list.append(_pad_mat(wm * sc[None, :])); b_rows[B_B1_PROJ] = _pad_vec(sh)

    # Head: 1x1 conv 16 -> HEAD_CH, BN folded.
    wm = rnd((BLOCK1["output_filters"], HEAD_CH))
    sc, sh = _bn_affine(next(ks), HEAD_CH)
    w_list.append(_pad_mat(wm * sc[None, :])); b_rows[B_HEAD] = _pad_vec(sh)

    assert len(w_list) == N_W and len(dw_list) == 2
    w_slab = jnp.stack(w_list).astype(jnp.bfloat16)             # (9, P, P) bf16
    dw_slab = jnp.stack(dw_list)                                # (2, 9, P) f32
    b_slab = jnp.zeros((B_SLAB_ROWS, P), jnp.float32)
    b_slab = b_slab.at[:N_BIAS].set(jnp.stack(b_rows))          # (16, P) f32
    return {"w_slab": w_slab, "dw_slab": dw_slab, "b_slab": b_slab}


# ---------------------------------- forward --------------------------------- #

def efficientnet_forward(x_nchw, params):
    """EfficientNet.forward (eval): extract_features -> avg pool; dropout=id, _fc=None."""
    x = jnp.transpose(x_nchw, (0, 2, 3, 1)).astype(jnp.float32)       # NCHW -> NHWC
    b = x.shape[0]

    # Stem im2col (wrapper-side layout plumbing; 27 real columns padded to 128).
    x2d, h0, w0 = _stem_im2col(x, k=3, s=2)
    assert h0 % 2 == 0 and w0 % 2 == 0, "stride-2 sampling assumes even stem output"
    m = b * h0 * w0

    kern = functools.partial(_effnet_fused_kernel, b=b, h=h0, w=w0)
    flops = 2 * P * P * (5 * m + 4 * b) + 2 * 2 * 9 * m * P
    bytes_accessed = (x2d.size * 2 + params["w_slab"].size * 2
                      + params["dw_slab"].size * 4 + params["b_slab"].size * 4
                      + b * P * 4)
    feats = pl.pallas_call(
        kern,
        out_shape=jax.ShapeDtypeStruct((b, P), jnp.float32),
        in_specs=[_vspec()] * 4,
        out_specs=_vspec(),
        cost_estimate=pl.CostEstimate(flops=flops, transcendentals=6 * m * P,
                                      bytes_accessed=bytes_accessed),
    )(x2d, params["w_slab"], params["dw_slab"], params["b_slab"])

    # Drop the channel padding; dropout is identity in eval; _fc is None.
    return feats[:, :HEAD_CH]


if __name__ == "__main__":
    key = jax.random.PRNGKey(0)
    k_params, k_x = jax.random.split(key)
    params = init_params(k_params)
    x = jax.random.normal(k_x, (2, 3, 16, 16), jnp.float32)           # NCHW input

    fwd = jax.jit(efficientnet_forward)
    out = jax.block_until_ready(fwd(x, params))

    assert out.shape == (2, HEAD_CH), out.shape
    assert bool(jnp.all(jnp.isfinite(out)))
    print("KERNEL_OK")
</pallas_src>

<mosaic_0001>
module attributes {stable_mosaic.version = 11 : i64} {
  func.func @_effnet_fused_kernel(%arg0: memref<128x128xbf16, #tpu.memory_space<vmem>>, %arg1: memref<9x128x128xbf16, #tpu.memory_space<vmem>>, %arg2: memref<2x9x128xf32, #tpu.memory_space<vmem>>, %arg3: memref<16x128xf32, #tpu.memory_space<vmem>>, %arg4: memref<2x128xf32, #tpu.memory_space<vmem>>) attributes {dimension_semantics = [], scalar_prefetch = 0 : i64, scratch_operands = 0 : i64, tpu.core_type = #tpu.core_type<tc>} {
    %c0 = arith.constant 0 : index
    %c0_0 = arith.constant 0 : index
    %0 = vector.load %arg0[%c0, %c0_0] : memref<128x128xbf16, #tpu.memory_space<vmem>>, vector<128x128xbf16>
    %c0_1 = arith.constant 0 : index
    %c0_2 = arith.constant 0 : index
    %c0_3 = arith.constant 0 : index
    %1 = vector.load %arg1[%c0_1, %c0_2, %c0_3] : memref<9x128x128xbf16, #tpu.memory_space<vmem>>, vector<1x128x128xbf16>
    %2 = vector.shape_cast %1 : vector<1x128x128xbf16> to vector<128x128xbf16>
    %cst = arith.constant dense<0.000000e+00> : vector<128x128xf32>
    %3 = tpu.matmul %0, %2, %cst {dimension_numbers = #tpu.dot_dimension_numbers<[1], [0], [0], [1], [0, 0, 1, 1], [], []>} : vector<128x128xbf16>, vector<128x128xbf16>, vector<128x128xf32> -> vector<128x128xf32>
    %c0_4 = arith.constant 0 : index
    %c0_5 = arith.constant 0 : index
    %4 = vector.load %arg3[%c0_4, %c0_5] : memref<16x128xf32, #tpu.memory_space<vmem>>, vector<1x128xf32>
    %5 = vector.shape_cast %4 : vector<1x128xf32> to vector<128xf32>
    %6 = vector.shape_cast %5 : vector<128xf32> to vector<1x128xf32>
    %7 = vector.broadcast %6 : vector<1x128xf32> to vector<128x128xf32>
    %8 = arith.addf %3, %7 : vector<128x128xf32>
    %cst_6 = arith.constant 0.000000e+00 : f32
    %9 = vector.broadcast %cst_6 : f32 to vector<128x128xf32>
    %10 = arith.subf %9, %8 : vector<128x128xf32>
    %11 = math.exp %10 : vector<128x128xf32>
    %cst_7 = arith.constant 1.000000e+00 : f32
    %12 = vector.broadcast %cst_7 : f32 to vector<128x128xf32>
    %13 = arith.addf %12, %11 : vector<128x128xf32>
    %14 = tpu.reciprocal %13 {approx = true} : vector<128x128xf32> -> vector<128x128xf32>
    %15 = arith.mulf %8, %14 : vector<128x128xf32>
    %16 = vector.shape_cast %15 : vector<128x128xf32> to vector<2x8x8x128xf32>
    %c0_8 = arith.constant 0 : index
    %c0_9 = arith.constant 0 : index
    %c0_10 = arith.constant 0 : index
    %17 = vector.load %arg2[%c0_8, %c0_9, %c0_10] : memref<2x9x128xf32, #tpu.memory_space<vmem>>, vector<1x9x128xf32>
    %18 = vector.shape_cast %17 : vector<1x9x128xf32> to vector<9x128xf32>
    %cst_11 = arith.constant 0.000000e+00 : f32
    %19 = vector.broadcast %cst_11 : f32 to vector<2x8x1x128xf32>
    %cst_12 = arith.constant 0.000000e+00 : f32
    %20 = vector.broadcast %cst_12 : f32 to vector<2x1x8x128xf32>
    %21 = tpu.concatenate %19, %16, %19 in 2 : vector<2x8x1x128xf32>, vector<2x8x8x128xf32>, vector<2x8x1x128xf32> -> vector<2x8x10x128xf32>
    %cst_13 = arith.constant 0.000000e+00 : f32
    %22 = vector.broadcast %cst_13 : f32 to vector<2x8x8x128xf32>
    %23 = vector.extract_strided_slice %21 {offsets = [0, 0, 0, 0], sizes = [2, 8, 8, 128], strides = [1, 1, 1, 1]} : vector<2x8x10x128xf32> to vector<2x8x8x128xf32>
    %24 = tpu.concatenate %20, %23, %20 in 1 : vector<2x1x8x128xf32>, vector<2x8x8x128xf32>, vector<2x1x8x128xf32> -> vector<2x10x8x128xf32>
    %25 = vector.extract_strided_slice %24 {offsets = [0, 0, 0, 0], sizes = [2, 8, 8, 128], strides = [1, 1, 1, 1]} : vector<2x10x8x128xf32> to vector<2x8x8x128xf32>
    %26 = vector.extract_strided_slice %18 {offsets = [0, 0], sizes = [1, 128], strides = [1, 1]} : vector<9x128xf32> to vector<1x128xf32>
    %27 = vector.shape_cast %26 : vector<1x128xf32> to vector<1x1x1x128xf32>
    %28 = vector.broadcast %27 : vector<1x1x1x128xf32> to vector<2x8x8x128xf32>
    %29 = arith.mulf %25, %28 : vector<2x8x8x128xf32>
    %30 = arith.addf %22, %29 : vector<2x8x8x128xf32>
    %31 = vector.extract_strided_slice %24 {offsets = [0, 1, 0, 0], sizes = [2, 8, 8, 128], strides = [1, 1, 1, 1]} : vector<2x10x8x128xf32> to vector<2x8x8x128xf32>
    %32 = vector.extract_strided_slice %18 {offsets = [3, 0], sizes = [1, 128], strides = [1, 1]} : vector<9x128xf32> to vector<1x128xf32>
    %33 = vector.shape_cast %32 : vector<1x128xf32> to vector<1x1x1x128xf32>
    %34 = vector.broadcast %33 : vector<1x1x1x128xf32> to vector<2x8x8x128xf32>
    %35 = arith.mulf %31, %34 : vector<2x8x8x128xf32>
    %36 = arith.addf %30, %35 : vector<2x8x8x128xf32>
    %37 = vector.extract_strided_slice %24 {offsets = [0, 2, 0, 0], sizes = [2, 8, 8, 128], strides = [1, 1, 1, 1]} : vector<2x10x8x128xf32> to vector<2x8x8x128xf32>
    %38 = vector.extract_strided_slice %18 {offsets = [6, 0], sizes = [1, 128], strides = [1, 1]} : vector<9x128xf32> to vector<1x128xf32>
    %39 = vector.shape_cast %38 : vector<1x128xf32> to vector<1x1x1x128xf32>
    %40 = vector.broadcast %39 : vector<1x1x1x128xf32> to vector<2x8x8x128xf32>
    %41 = arith.mulf %37, %40 : vector<2x8x8x128xf32>
    %42 = arith.addf %36, %41 : vector<2x8x8x128xf32>
    %43 = vector.extract_strided_slice %21 {offsets = [0, 0, 1, 0], sizes = [2, 8, 8, 128], strides = [1, 1, 1, 1]} : vector<2x8x10x128xf32> to vector<2x8x8x128xf32>
    %44 = tpu.concatenate %20, %43, %20 in 1 : vector<2x1x8x128xf32>, vector<2x8x8x128xf32>, vector<2x1x8x128xf32> -> vector<2x10x8x128xf32>
    %45 = vector.extract_strided_slice %44 {offsets = [0, 0, 0, 0], sizes = [2, 8, 8, 128], strides = [1, 1, 1, 1]} : vector<2x10x8x128xf32> to vector<2x8x8x128xf32>
    %46 = vector.extract_strided_slice %18 {offsets = [1, 0], sizes = [1, 128], strides = [1, 1]} : vector<9x128xf32> to vector<1x128xf32>
    %47 = vector.shape_cast %46 : vector<1x128xf32> to vector<1x1x1x128xf32>
    %48 = vector.broadcast %47 : vector<1x1x1x128xf32> to vector<2x8x8x128xf32>
    %49 = arith.mulf %45, %48 : vector<2x8x8x128xf32>
    %50 = arith.addf %42, %49 : vector<2x8x8x128xf32>
    %51 = vector.extract_strided_slice %44 {offsets = [0, 1, 0, 0], sizes = [2, 8, 8, 128], strides = [1, 1, 1, 1]} : vector<2x10x8x128xf32> to vector<2x8x8x128xf32>
    %52 = vector.extract_strided_slice %18 {offsets = [4, 0], sizes = [1, 128], strides = [1, 1]} : vector<9x128xf32> to vector<1x128xf32>
    %53 = vector.shape_cast %52 : vector<1x128xf32> to vector<1x1x1x128xf32>
    %54 = vector.broadcast %53 : vector<1x1x1x128xf32> to vector<2x8x8x128xf32>
    %55 = arith.mulf %51, %54 : vector<2x8x8x128xf32>
    %56 = arith.addf %50, %55 : vector<2x8x8x128xf32>
    %57 = vector.extract_strided_slice %44 {offsets = [0, 2, 0, 0], sizes = [2, 8, 8, 128], strides = [1, 1, 1, 1]} : vector<2x10x8x128xf32> to vector<2x8x8x128xf32>
    %58 = vector.extract_strided_slice %18 {offsets = [7, 0], sizes = [1, 128], strides = [1, 1]} : vector<9x128xf32> to vector<1x128xf32>
    %59 = vector.shape_cast %58 : vector<1x128xf32> to vector<1x1x1x128xf32>
    %60 = vector.broadcast %59 : vector<1x1x1x128xf32> to vector<2x8x8x128xf32>
    %61 = arith.mulf %57, %60 : vector<2x8x8x128xf32>
    %62 = arith.addf %56, %61 : vector<2x8x8x128xf32>
    %63 = vector.extract_strided_slice %21 {offsets = [0, 0, 2, 0], sizes = [2, 8, 8, 128], strides = [1, 1, 1, 1]} : vector<2x8x10x128xf32> to vector<2x8x8x128xf32>
    %64 = tpu.concatenate %20, %63, %20 in 1 : vector<2x1x8x128xf32>, vector<2x8x8x128xf32>, vector<2x1x8x128xf32> -> vector<2x10x8x128xf32>
    %65 = vector.extract_strided_slice %64 {offsets = [0, 0, 0, 0], sizes = [2, 8, 8, 128], strides = [1, 1, 1, 1]} : vector<2x10x8x128xf32> to vector<2x8x8x128xf32>
    %66 = vector.extract_strided_slice %18 {offsets = [2, 0], sizes = [1, 128], strides = [1, 1]} : vector<9x128xf32> to vector<1x128xf32>
    %67 = vector.shape_cast %66 : vector<1x128xf32> to vector<1x1x1x128xf32>
    %68 = vector.broadcast %67 : vector<1x1x1x128xf32> to vector<2x8x8x128xf32>
    %69 = arith.mulf %65, %68 : vector<2x8x8x128xf32>
    %70 = arith.addf %62, %69 : vector<2x8x8x128xf32>
    %71 = vector.extract_strided_slice %64 {offsets = [0, 1, 0, 0], sizes = [2, 8, 8, 128], strides = [1, 1, 1, 1]} : vector<2x10x8x128xf32> to vector<2x8x8x128xf32>
    %72 = vector.extract_strided_slice %18 {offsets = [5, 0], sizes = [1, 128], strides = [1, 1]} : vector<9x128xf32> to vector<1x128xf32>
    %73 = vector.shape_cast %72 : vector<1x128xf32> to vector<1x1x1x128xf32>
    %74 = vector.broadcast %73 : vector<1x1x1x128xf32> to vector<2x8x8x128xf32>
    %75 = arith.mulf %71, %74 : vector<2x8x8x128xf32>
    %76 = arith.addf %70, %75 : vector<2x8x8x128xf32>
    %77 = vector.extract_strided_slice %64 {offsets = [0, 2, 0, 0], sizes = [2, 8, 8, 128], strides = [1, 1, 1, 1]} : vector<2x10x8x128xf32> to vector<2x8x8x128xf32>
    %78 = vector.extract_strided_slice %18 {offsets = [8, 0], sizes = [1, 128], strides = [1, 1]} : vector<9x128xf32> to vector<1x128xf32>
    %79 = vector.shape_cast %78 : vector<1x128xf32> to vector<1x1x1x128xf32>
    %80 = vector.broadcast %79 : vector<1x1x1x128xf32> to vector<2x8x8x128xf32>
    %81 = arith.mulf %77, %80 : vector<2x8x8x128xf32>
    %82 = arith.addf %76, %81 : vector<2x8x8x128xf32>
    %c1 = arith.constant 1 : index
    %c0_14 = arith.constant 0 : index
    %83 = vector.load %arg3[%c1, %c0_14] : memref<16x128xf32, #tpu.memory_space<vmem>>, vector<1x128xf32>
    %84 = vector.shape_cast %83 : vector<1x128xf32> to vector<128xf32>
    %85 = vector.shape_cast %84 : vector<128xf32> to vector<1x1x1x128xf32>
    %86 = vector.broadcast %85 : vector<1x1x1x128xf32> to vector<2x8x8x128xf32>
    %87 = arith.addf %82, %86 : vector<2x8x8x128xf32>
    %cst_15 = arith.constant 0.000000e+00 : f32
    %88 = vector.broadcast %cst_15 : f32 to vector<2x8x8x128xf32>
    %89 = arith.subf %88, %87 : vector<2x8x8x128xf32>
    %90 = math.exp %89 : vector<2x8x8x128xf32>
    %cst_16 = arith.constant 1.000000e+00 : f32
    %91 = vector.broadcast %cst_16 : f32 to vector<2x8x8x128xf32>
    %92 = arith.addf %91, %90 : vector<2x8x8x128xf32>
    %93 = tpu.reciprocal %92 {approx = true} : vector<2x8x8x128xf32> -> vector<2x8x8x128xf32>
    %94 = arith.mulf %87, %93 : vector<2x8x8x128xf32>
    %cst_17 = arith.constant dense<0.000000e+00> : vector<2x128xf32>
    %95 = vector.multi_reduction <add>, %94, %cst_17 [1, 2] : vector<2x8x8x128xf32> to vector<2x128xf32>
    %cst_18 = arith.constant 6.400000e+01 : f32
    %96 = vector.broadcast %cst_18 : f32 to vector<2x128xf32>
    %97 = arith.divf %95, %96 : vector<2x128xf32>
    %98 = arith.truncf %97 : vector<2x128xf32> to vector<2x128xbf16>
    %c1_19 = arith.constant 1 : index
    %c0_20 = arith.constant 0 : index
    %c0_21 = arith.constant 0 : index
    %99 = vector.load %arg1[%c1_19, %c0_20, %c0_21] : memref<9x128x128xbf16, #tpu.memory_space<vmem>>, vector<1x128x128xbf16>
    %100 = vector.shape_cast %99 : vector<1x128x128xbf16> to vector<128x128xbf16>
    %cst_22 = arith.constant dense<0.000000e+00> : vector<2x128xf32>
    %101 = tpu.matmul %98, %100, %cst_22 {dimension_numbers = #tpu.dot_dimension_numbers<[1], [0], [0], [1], [0, 0, 1, 1], [], []>} : vector<2x128xbf16>, vector<128x128xbf16>, vector<2x128xf32> -> vector<2x128xf32>
    %c2 = arith.constant 2 : index
    %c0_23 = arith.constant 0 : index
    %102 = vector.load %arg3[%c2, %c0_23] : memref<16x128xf32, #tpu.memory_space<vmem>>, vector<1x128xf32>
    %103 = vector.shape_cast %102 : vector<1x128xf32> to vector<128xf32>
    %104 = vector.shape_cast %103 : vector<128xf32> to vector<1x128xf32>
    %105 = vector.broadcast %104 : vector<1x128xf32> to vector<2x128xf32>
    %106 = arith.addf %101, %105 : vector<2x128xf32>
    %cst_24 = arith.constant 0.000000e+00 : f32
    %107 = vector.broadcast %cst_24 : f32 to vector<2x128xf32>
    %108 = arith.subf %107, %106 : vector<2x128xf32>
    %109 = math.exp %108 : vector<2x128xf32>
    %cst_25 = arith.constant 1.000000e+00 : f32
    %110 = vector.broadcast %cst_25 : f32 to vector<2x128xf32>
    %111 = arith.addf %110, %109 : vector<2x128xf32>
    %112 = tpu.reciprocal %111 {approx = true} : vector<2x128xf32> -> vector<2x128xf32>
    %113 = arith.mulf %106, %112 : vector<2x128xf32>
    %114 = arith.truncf %113 : vector<2x128xf32> to vector<2x128xbf16>
    %c2_26 = arith.constant 2 : index
    %c0_27 = arith.constant 0 : index
    %c0_28 = arith.constant 0 : index
    %115 = vector.load %arg1[%c2_26, %c0_27, %c0_28] : memref<9x128x128xbf16, #tpu.memory_space<vmem>>, vector<1x128x128xbf16>
    %116 = vector.shape_cast %115 : vector<1x128x128xbf16> to vector<128x128xbf16>
    %cst_29 = arith.constant dense<0.000000e+00> : vector<2x128xf32>
    %117 = tpu.matmul %114, %116, %cst_29 {dimension_numbers = #tpu.dot_dimension_numbers<[1], [0], [0], [1], [0, 0, 1, 1], [], []>} : vector<2x128xbf16>, vector<128x128xbf16>, vector<2x128xf32> -> vector<2x128xf32>
    %c3 = arith.constant 3 : index
    %c0_30 = arith.constant 0 : index
    %118 = vector.load %arg3[%c3, %c0_30] : memref<16x128xf32, #tpu.memory_space<vmem>>, vector<1x128xf32>
    %119 = vector.shape_cast %118 : vector<1x128xf32> to vector<128xf32>
    %120 = vector.shape_cast %119 : vector<128xf32> to vector<1x128xf32>
    %121 = vector.broadcast %120 : vector<1x128xf32> to vector<2x128xf32>
    %122 = arith.addf %117, %121 : vector<2x128xf32>
    %cst_31 = arith.constant 0.000000e+00 : f32
    %123 = vector.broadcast %cst_31 : f32 to vector<2x128xf32>
    %124 = arith.subf %123, %122 : vector<2x128xf32>
    %125 = math.exp %124 : vector<2x128xf32>
    %cst_32 = arith.constant 1.000000e+00 : f32
    %126 = vector.broadcast %cst_32 : f32 to vector<2x128xf32>
    %127 = arith.addf %126, %125 : vector<2x128xf32>
    %128 = tpu.reciprocal %127 {approx = true} : vector<2x128xf32> -> vector<2x128xf32>
    %129 = vector.shape_cast %128 : vector<2x128xf32> to vector<2x1x1x128xf32>
    %130 = vector.broadcast %129 : vector<2x1x1x128xf32> to vector<2x8x8x128xf32>
    %131 = arith.mulf %94, %130 : vector<2x8x8x128xf32>
    %132 = vector.shape_cast %131 : vector<2x8x8x128xf32> to vector<128x128xf32>
    %133 = arith.truncf %132 : vector<128x128xf32> to vector<128x128xbf16>
    %c3_33 = arith.constant 3 : index
    %c0_34 = arith.constant 0 : index
    %c0_35 = arith.constant 0 : index
    %134 = vector.load %arg1[%c3_33, %c0_34, %c0_35] : memref<9x128x128xbf16, #tpu.memory_space<vmem>>, vector<1x128x128xbf16>
    %135 = vector.shape_cast %134 : vector<1x128x128xbf16> to vector<128x128xbf16>
    %cst_36 = arith.constant dense<0.000000e+00> : vector<128x128xf32>
    %136 = tpu.matmul %133, %135, %cst_36 {dimension_numbers = #tpu.dot_dimension_numbers<[1], [0], [0], [1], [0, 0, 1, 1], [], []>} : vector<128x128xbf16>, vector<128x128xbf16>, vector<128x128xf32> -> vector<128x128xf32>
    %c4 = arith.constant 4 : index
    %c0_37 = arith.constant 0 : index
    %137 = vector.load %arg3[%c4, %c0_37] : memref<16x128xf32, #tpu.memory_space<vmem>>, vector<1x128xf32>
    %138 = vector.shape_cast %137 : vector<1x128xf32> to vector<128xf32>
    %139 = vector.shape_cast %138 : vector<128xf32> to vector<1x128xf32>
    %140 = vector.broadcast %139 : vector<1x128xf32> to vector<128x128xf32>
    %141 = arith.addf %136, %140 : vector<128x128xf32>
    %142 = arith.addf %141, %15 : vector<128x128xf32>
    %143 = arith.truncf %142 : vector<128x128xf32> to vector<128x128xbf16>
    %c4_38 = arith.constant 4 : index
    %c0_39 = arith.constant 0 : index
    %c0_40 = arith.constant 0 : index
    %144 = vector.load %arg1[%c4_38, %c0_39, %c0_40] : memref<9x128x128xbf16, #tpu.memory_space<vmem>>, vector<1x128x128xbf16>
    %145 = vector.shape_cast %144 : vector<1x128x128xbf16> to vector<128x128xbf16>
    %cst_41 = arith.constant dense<0.000000e+00> : vector<128x128xf32>
    %146 = tpu.matmul %143, %145, %cst_41 {dimension_numbers = #tpu.dot_dimension_numbers<[1], [0], [0], [1], [0, 0, 1, 1], [], []>} : vector<128x128xbf16>, vector<128x128xbf16>, vector<128x128xf32> -> vector<128x128xf32>
    %c5 = arith.constant 5 : index
    %c0_42 = arith.constant 0 : index
    %147 = vector.load %arg3[%c5, %c0_42] : memref<16x128xf32, #tpu.memory_space<vmem>>, vector<1x128xf32>
    %148 = vector.shape_cast %147 : vector<1x128xf32> to vector<128xf32>
    %149 = vector.shape_cast %148 : vector<128xf32> to vector<1x128xf32>
    %150 = vector.broadcast %149 : vector<1x128xf32> to vector<128x128xf32>
    %151 = arith.addf %146, %150 : vector<128x128xf32>
    %cst_43 = arith.constant 0.000000e+00 : f32
    %152 = vector.broadcast %cst_43 : f32 to vector<128x128xf32>
    %153 = arith.subf %152, %151 : vector<128x128xf32>
    %154 = math.exp %153 : vector<128x128xf32>
    %cst_44 = arith.constant 1.000000e+00 : f32
    %155 = vector.broadcast %cst_44 : f32 to vector<128x128xf32>
    %156 = arith.addf %155, %154 : vector<128x128xf32>
    %157 = tpu.reciprocal %156 {approx = true} : vector<128x128xf32> -> vector<128x128xf32>
    %158 = arith.mulf %151, %157 : vector<128x128xf32>
    %159 = vector.shape_cast %158 : vector<128x128xf32> to vector<2x8x8x128xf32>
    %c1_45 = arith.constant 1 : index
    %c0_46 = arith.constant 0 : index
    %c0_47 = arith.constant 0 : index
    %160 = vector.load %arg2[%c1_45, %c0_46, %c0_47] : memref<2x9x128xf32, #tpu.memory_space<vmem>>, vector<1x9x128xf32>
    %161 = vector.shape_cast %160 : vector<1x9x128xf32> to vector<9x128xf32>
    %cst_48 = arith.constant 0.000000e+00 : f32
    %162 = vector.broadcast %cst_48 : f32 to vector<2x8x1x128xf32>
    %cst_49 = arith.constant 0.000000e+00 : f32
    %163 = vector.broadcast %cst_49 : f32 to vector<2x1x8x128xf32>
    %164 = tpu.concatenate %162, %159, %162 in 2 : vector<2x8x1x128xf32>, vector<2x8x8x128xf32>, vector<2x8x1x128xf32> -> vector<2x8x10x128xf32>
    %cst_50 = arith.constant 0.000000e+00 : f32
    %165 = vector.broadcast %cst_50 : f32 to vector<2x8x8x128xf32>
    %166 = vector.extract_strided_slice %164 {offsets = [0, 0, 0, 0], sizes = [2, 8, 8, 128], strides = [1, 1, 1, 1]} : vector<2x8x10x128xf32> to vector<2x8x8x128xf32>
    %167 = tpu.concatenate %163, %166, %163 in 1 : vector<2x1x8x128xf32>, vector<2x8x8x128xf32>, vector<2x1x8x128xf32> -> vector<2x10x8x128xf32>
    %168 = vector.extract_strided_slice %167 {offsets = [0, 0, 0, 0], sizes = [2, 8, 8, 128], strides = [1, 1, 1, 1]} : vector<2x10x8x128xf32> to vector<2x8x8x128xf32>
    %169 = vector.extract_strided_slice %161 {offsets = [0, 0], sizes = [1, 128], strides = [1, 1]} : vector<9x128xf32> to vector<1x128xf32>
    %170 = vector.shape_cast %169 : vector<1x128xf32> to vector<1x1x1x128xf32>
    %171 = vector.broadcast %170 : vector<1x1x1x128xf32> to vector<2x8x8x128xf32>
    %172 = arith.mulf %168, %171 : vector<2x8x8x128xf32>
    %173 = arith.addf %165, %172 : vector<2x8x8x128xf32>
    %174 = vector.extract_strided_slice %167 {offsets = [0, 1, 0, 0], sizes = [2, 8, 8, 128], strides = [1, 1, 1, 1]} : vector<2x10x8x128xf32> to vector<2x8x8x128xf32>
    %175 = vector.extract_strided_slice %161 {offsets = [3, 0], sizes = [1, 128], strides = [1, 1]} : vector<9x128xf32> to vector<1x128xf32>
    %176 = vector.shape_cast %175 : vector<1x128xf32> to vector<1x1x1x128xf32>
    %177 = vector.broadcast %176 : vector<1x1x1x128xf32> to vector<2x8x8x128xf32>
    %178 = arith.mulf %174, %177 : vector<2x8x8x128xf32>
    %179 = arith.addf %173, %178 : vector<2x8x8x128xf32>
    %180 = vector.extract_strided_slice %167 {offsets = [0, 2, 0, 0], sizes = [2, 8, 8, 128], strides = [1, 1, 1, 1]} : vector<2x10x8x128xf32> to vector<2x8x8x128xf32>
    %181 = vector.extract_strided_slice %161 {offsets = [6, 0], sizes = [1, 128], strides = [1, 1]} : vector<9x128xf32> to vector<1x128xf32>
    %182 = vector.shape_cast %181 : vector<1x128xf32> to vector<1x1x1x128xf32>
    %183 = vector.broadcast %182 : vector<1x1x1x128xf32> to vector<2x8x8x128xf32>
    %184 = arith.mulf %180, %183 : vector<2x8x8x128xf32>
    %185 = arith.addf %179, %184 : vector<2x8x8x128xf32>
    %186 = vector.extract_strided_slice %164 {offsets = [0, 0, 1, 0], sizes = [2, 8, 8, 128], strides = [1, 1, 1, 1]} : vector<2x8x10x128xf32> to vector<2x8x8x128xf32>
    %187 = tpu.concatenate %163, %186, %163 in 1 : vector<2x1x8x128xf32>, vector<2x8x8x128xf32>, vector<2x1x8x128xf32> -> vector<2x10x8x128xf32>
    %188 = vector.extract_strided_slice %187 {offsets = [0, 0, 0, 0], sizes = [2, 8, 8, 128], strides = [1, 1, 1, 1]} : vector<2x10x8x128xf32> to vector<2x8x8x128xf32>
    %189 = vector.extract_strided_slice %161 {offsets = [1, 0], sizes = [1, 128], strides = [1, 1]} : vector<9x128xf32> to vector<1x128xf32>
    %190 = vector.shape_cast %189 : vector<1x128xf32> to vector<1x1x1x128xf32>
    %191 = vector.broadcast %190 : vector<1x1x1x128xf32> to vector<2x8x8x128xf32>
    %192 = arith.mulf %188, %191 : vector<2x8x8x128xf32>
    %193 = arith.addf %185, %192 : vector<2x8x8x128xf32>
    %194 = vector.extract_strided_slice %187 {offsets = [0, 1, 0, 0], sizes = [2, 8, 8, 128], strides = [1, 1, 1, 1]} : vector<2x10x8x128xf32> to vector<2x8x8x128xf32>
    %195 = vector.extract_strided_slice %161 {offsets = [4, 0], sizes = [1, 128], strides = [1, 1]} : vector<9x128xf32> to vector<1x128xf32>
    %196 = vector.shape_cast %195 : vector<1x128xf32> to vector<1x1x1x128xf32>
    %197 = vector.broadcast %196 : vector<1x1x1x128xf32> to vector<2x8x8x128xf32>
    %198 = arith.mulf %194, %197 : vector<2x8x8x128xf32>
    %199 = arith.addf %193, %198 : vector<2x8x8x128xf32>
    %200 = vector.extract_strided_slice %187 {offsets = [0, 2, 0, 0], sizes = [2, 8, 8, 128], strides = [1, 1, 1, 1]} : vector<2x10x8x128xf32> to vector<2x8x8x128xf32>
    %201 = vector.extract_strided_slice %161 {offsets = [7, 0], sizes = [1, 128], strides = [1, 1]} : vector<9x128xf32> to vector<1x128xf32>
    %202 = vector.shape_cast %201 : vector<1x128xf32> to vector<1x1x1x128xf32>
    %203 = vector.broadcast %202 : vector<1x1x1x128xf32> to vector<2x8x8x128xf32>
    %204 = arith.mulf %200, %203 : vector<2x8x8x128xf32>
    %205 = arith.addf %199, %204 : vector<2x8x8x128xf32>
    %206 = vector.extract_strided_slice %164 {offsets = [0, 0, 2, 0], sizes = [2, 8, 8, 128], strides = [1, 1, 1, 1]} : vector<2x8x10x128xf32> to vector<2x8x8x128xf32>
    %207 = tpu.concatenate %163, %206, %163 in 1 : vector<2x1x8x128xf32>, vector<2x8x8x128xf32>, vector<2x1x8x128xf32> -> vector<2x10x8x128xf32>
    %208 = vector.extract_strided_slice %207 {offsets = [0, 0, 0, 0], sizes = [2, 8, 8, 128], strides = [1, 1, 1, 1]} : vector<2x10x8x128xf32> to vector<2x8x8x128xf32>
    %209 = vector.extract_strided_slice %161 {offsets = [2, 0], sizes = [1, 128], strides = [1, 1]} : vector<9x128xf32> to vector<1x128xf32>
    %210 = vector.shape_cast %209 : vector<1x128xf32> to vector<1x1x1x128xf32>
    %211 = vector.broadcast %210 : vector<1x1x1x128xf32> to vector<2x8x8x128xf32>
    %212 = arith.mulf %208, %211 : vector<2x8x8x128xf32>
    %213 = arith.addf %205, %212 : vector<2x8x8x128xf32>
    %214 = vector.extract_strided_slice %207 {offsets = [0, 1, 0, 0], sizes = [2, 8, 8, 128], strides = [1, 1, 1, 1]} : vector<2x10x8x128xf32> to vector<2x8x8x128xf32>
    %215 = vector.extract_strided_slice %161 {offsets = [5, 0], sizes = [1, 128], strides = [1, 1]} : vector<9x128xf32> to vector<1x128xf32>
    %216 = vector.shape_cast %215 : vector<1x128xf32> to vector<1x1x1x128xf32>
    %217 = vector.broadcast %216 : vector<1x1x1x128xf32> to vector<2x8x8x128xf32>
    %218 = arith.mulf %214, %217 : vector<2x8x8x128xf32>
    %219 = arith.addf %213, %218 : vector<2x8x8x128xf32>
    %220 = vector.extract_strided_slice %207 {offsets = [0, 2, 0, 0], sizes = [2, 8, 8, 128], strides = [1, 1, 1, 1]} : vector<2x10x8x128xf32> to vector<2x8x8x128xf32>
    %221 = vector.extract_strided_slice %161 {offsets = [8, 0], sizes = [1, 128], strides = [1, 1]} : vector<9x128xf32> to vector<1x128xf32>
    %222 = vector.shape_cast %221 : vector<1x128xf32> to vector<1x1x1x128xf32>
    %223 = vector.broadcast %222 : vector<1x1x1x128xf32> to vector<2x8x8x128xf32>
    %224 = arith.mulf %220, %223 : vector<2x8x8x128xf32>
    %225 = arith.addf %219, %224 : vector<2x8x8x128xf32>
    %c6 = arith.constant 6 : index
    %c0_51 = arith.constant 0 : index
    %226 = vector.load %arg3[%c6, %c0_51] : memref<16x128xf32, #tpu.memory_space<vmem>>, vector<1x128xf32>
    %227 = vector.shape_cast %226 : vector<1x128xf32> to vector<128xf32>
    %228 = vector.shape_cast %227 : vector<128xf32> to vector<1x1x1x128xf32>
    %229 = vector.broadcast %228 : vector<1x1x1x128xf32> to vector<2x8x8x128xf32>
    %230 = arith.addf %225, %229 : vector<2x8x8x128xf32>
    %cst_52 = arith.constant 0.000000e+00 : f32
    %231 = vector.broadcast %cst_52 : f32 to vector<2x8x8x128xf32>
    %232 = arith.subf %231, %230 : vector<2x8x8x128xf32>
    %233 = math.exp %232 : vector<2x8x8x128xf32>
    %cst_53 = arith.constant 1.000000e+00 : f32
    %234 = vector.broadcast %cst_53 : f32 to vector<2x8x8x128xf32>
    %235 = arith.addf %234, %233 : vector<2x8x8x128xf32>
    %236 = tpu.reciprocal %235 {approx = true} : vector<2x8x8x128xf32> -> vector<2x8x8x128xf32>
    %237 = arith.mulf %230, %236 : vector<2x8x8x128xf32>
    %238 = tpu.iota {dimensions = array<i32: 1>} : vector<2x8x8x128xi32>
    %239 = tpu.iota {dimensions = array<i32: 2>} : vector<2x8x8x128xi32>
    %c2_i32 = arith.constant 2 : i32
    %c0_i32 = arith.constant 0 : i32
    %240 = arith.cmpi eq, %c2_i32, %c0_i32 : i32
    %c1_i32 = arith.constant 1 : i32
    %241 = arith.select %240, %c1_i32, %c2_i32 : i32
    %242 = vector.broadcast %241 : i32 to vector<2x8x8x128xi32>
    %243 = arith.remsi %238, %242 : vector<2x8x8x128xi32>
    %c0_i32_54 = arith.constant 0 : i32
    %244 = vector.broadcast %c0_i32_54 : i32 to vector<2x8x8x128xi32>
    %245 = arith.cmpi ne, %243, %244 : vector<2x8x8x128xi32>
    %c0_i32_55 = arith.constant 0 : i32
    %246 = vector.broadcast %c0_i32_55 : i32 to vector<2x8x8x128xi32>
    %247 = arith.cmpi slt, %243, %246 : vector<2x8x8x128xi32>
    %c0_i32_56 = arith.constant 0 : i32
    %248 = arith.cmpi slt, %241, %c0_i32_56 : i32
    %249 = vector.broadcast %248 : i1 to vector<2x8x8x128xi1>
    %250 = vector.broadcast %249 : vector<2x8x8x128xi1> to vector<2x8x8x128xi1>
    %251 = arith.xori %247, %250 : vector<2x8x8x128xi1>
    %252 = arith.andi %251, %245 : vector<2x8x8x128xi1>
    %253 = vector.broadcast %241 : i32 to vector<2x8x8x128xi32>
    %254 = arith.addi %243, %253 : vector<2x8x8x128xi32>
    %255 = arith.select %252, %254, %243 : vector<2x8x8x128xi1>, vector<2x8x8x128xi32>
    %c1_i32_57 = arith.constant 1 : i32
    %256 = vector.broadcast %c1_i32_57 : i32 to vector<2x8x8x128xi32>
    %257 = arith.cmpi eq, %255, %256 : vector<2x8x8x128xi32>
    %c2_i32_58 = arith.constant 2 : i32
    %c0_i32_59 = arith.constant 0 : i32
    %258 = arith.cmpi eq, %c2_i32_58, %c0_i32_59 : i32
    %c1_i32_60 = arith.constant 1 : i32
    %259 = arith.select %258, %c1_i32_60, %c2_i32_58 : i32
    %260 = vector.broadcast %259 : i32 to vector<2x8x8x128xi32>
    %261 = arith.remsi %239, %260 : vector<2x8x8x128xi32>
    %c0_i32_61 = arith.constant 0 : i32
    %262 = vector.broadcast %c0_i32_61 : i32 to vector<2x8x8x128xi32>
    %263 = arith.cmpi ne, %261, %262 : vector<2x8x8x128xi32>
    %c0_i32_62 = arith.constant 0 : i32
    %264 = vector.broadcast %c0_i32_62 : i32 to vector<2x8x8x128xi32>
    %265 = arith.cmpi slt, %261, %264 : vector<2x8x8x128xi32>
    %c0_i32_63 = arith.constant 0 : i32
    %266 = arith.cmpi slt, %259, %c0_i32_63 : i32
    %267 = vector.broadcast %266 : i1 to vector<2x8x8x128xi1>
    %268 = vector.broadcast %267 : vector<2x8x8x128xi1> to vector<2x8x8x128xi1>
    %269 = arith.xori %265, %268 : vector<2x8x8x128xi1>
    %270 = arith.andi %269, %263 : vector<2x8x8x128xi1>
    %271 = vector.broadcast %259 : i32 to vector<2x8x8x128xi32>
    %272 = arith.addi %261, %271 : vector<2x8x8x128xi32>
    %273 = arith.select %270, %272, %261 : vector<2x8x8x128xi1>, vector<2x8x8x128xi32>
    %c1_i32_64 = arith.constant 1 : i32
    %274 = vector.broadcast %c1_i32_64 : i32 to vector<2x8x8x128xi32>
    %275 = arith.cmpi eq, %273, %274 : vector<2x8x8x128xi32>
    %276 = arith.andi %257, %275 : vector<2x8x8x128xi1>
    %cst_65 = arith.constant 0.000000e+00 : f32
    %277 = vector.broadcast %cst_65 : f32 to vector<2x8x8x128xf32>
    %278 = arith.select %276, %237, %277 : vector<2x8x8x128xi1>, vector<2x8x8x128xf32>
    %cst_66 = arith.constant dense<0.000000e+00> : vector<2x128xf32>
    %279 = vector.multi_reduction <add>, %278, %cst_66 [1, 2] : vector<2x8x8x128xf32> to vector<2x128xf32>
    %cst_67 = arith.constant 6.250000e-02 : f32
    %280 = vector.broadcast %cst_67 : f32 to vector<2x128xf32>
    %281 = arith.mulf %279, %280 : vector<2x128xf32>
    %282 = arith.truncf %281 : vector<2x128xf32> to vector<2x128xbf16>
    %c5_68 = arith.constant 5 : index
    %c0_69 = arith.constant 0 : index
    %c0_70 = arith.constant 0 : index
    %283 = vector.load %arg1[%c5_68, %c0_69, %c0_70] : memref<9x128x128xbf16, #tpu.memory_space<vmem>>, vector<1x128x128xbf16>
    %284 = vector.shape_cast %283 : vector<1x128x128xbf16> to vector<128x128xbf16>
    %cst_71 = arith.constant dense<0.000000e+00> : vector<2x128xf32>
    %285 = tpu.matmul %282, %284, %cst_71 {dimension_numbers = #tpu.dot_dimension_numbers<[1], [0], [0], [1], [0, 0, 1, 1], [], []>} : vector<2x128xbf16>, vector<128x128xbf16>, vector<2x128xf32> -> vector<2x128xf32>
    %c7 = arith.constant 7 : index
    %c0_72 = arith.constant 0 : index
    %286 = vector.load %arg3[%c7, %c0_72] : memref<16x128xf32, #tpu.memory_space<vmem>>, vector<1x128xf32>
    %287 = vector.shape_cast %286 : vector<1x128xf32> to vector<128xf32>
    %288 = vector.shape_cast %287 : vector<128xf32> to vector<1x128xf32>
    %289 = vector.broadcast %288 : vector<1x128xf32> to vector<2x128xf32>
    %290 = arith.addf %285, %289 : vector<2x128xf32>
    %cst_73 = arith.constant 0.000000e+00 : f32
    %291 = vector.broadcast %cst_73 : f32 to vector<2x128xf32>
    %292 = arith.subf %291, %290 : vector<2x128xf32>
    %293 = math.exp %292 : vector<2x128xf32>
    %cst_74 = arith.constant 1.000000e+00 : f32
    %294 = vector.broadcast %cst_74 : f32 to vector<2x128xf32>
    %295 = arith.addf %294, %293 : vector<2x128xf32>
    %296 = tpu.reciprocal %295 {approx = true} : vector<2x128xf32> -> vector<2x128xf32>
    %297 = arith.mulf %290, %296 : vector<2x128xf32>
    %298 = arith.truncf %297 : vector<2x128xf32> to vector<2x128xbf16>
    %c6_75 = arith.constant 6 : index
    %c0_76 = arith.constant 0 : index
    %c0_77 = arith.constant 0 : index
    %299 = vector.load %arg1[%c6_75, %c0_76, %c0_77] : memref<9x128x128xbf16, #tpu.memory_space<vmem>>, vector<1x128x128xbf16>
    %300 = vector.shape_cast %299 : vector<1x128x128xbf16> to vector<128x128xbf16>
    %cst_78 = arith.constant dense<0.000000e+00> : vector<2x128xf32>
    %301 = tpu.matmul %298, %300, %cst_78 {dimension_numbers = #tpu.dot_dimension_numbers<[1], [0], [0], [1], [0, 0, 1, 1], [], []>} : vector<2x128xbf16>, vector<128x128xbf16>, vector<2x128xf32> -> vector<2x128xf32>
    %c8 = arith.constant 8 : index
    %c0_79 = arith.constant 0 : index
    %302 = vector.load %arg3[%c8, %c0_79] : memref<16x128xf32, #tpu.memory_space<vmem>>, vector<1x128xf32>
    %303 = vector.shape_cast %302 : vector<1x128xf32> to vector<128xf32>
    %304 = vector.shape_cast %303 : vector<128xf32> to vector<1x128xf32>
    %305 = vector.broadcast %304 : vector<1x128xf32> to vector<2x128xf32>
    %306 = arith.addf %301, %305 : vector<2x128xf32>
    %cst_80 = arith.constant 0.000000e+00 : f32
    %307 = vector.broadcast %cst_80 : f32 to vector<2x128xf32>
    %308 = arith.subf %307, %306 : vector<2x128xf32>
    %309 = math.exp %308 : vector<2x128xf32>
    %cst_81 = arith.constant 1.000000e+00 : f32
    %310 = vector.broadcast %cst_81 : f32 to vector<2x128xf32>
    %311 = arith.addf %310, %309 : vector<2x128xf32>
    %312 = tpu.reciprocal %311 {approx = true} : vector<2x128xf32> -> vector<2x128xf32>
    %313 = vector.shape_cast %312 : vector<2x128xf32> to vector<2x1x1x128xf32>
    %314 = vector.broadcast %313 : vector<2x1x1x128xf32> to vector<2x8x8x128xf32>
    %315 = arith.mulf %278, %314 : vector<2x8x8x128xf32>
    %316 = vector.shape_cast %315 : vector<2x8x8x128xf32> to vector<128x128xf32>
    %317 = arith.truncf %316 : vector<128x128xf32> to vector<128x128xbf16>
    %c7_82 = arith.constant 7 : index
    %c0_83 = arith.constant 0 : index
    %c0_84 = arith.constant 0 : index
    %318 = vector.load %arg1[%c7_82, %c0_83, %c0_84] : memref<9x128x128xbf16, #tpu.memory_space<vmem>>, vector<1x128x128xbf16>
    %319 = vector.shape_cast %318 : vector<1x128x128xbf16> to vector<128x128xbf16>
    %cst_85 = arith.constant dense<0.000000e+00> : vector<128x128xf32>
    %320 = tpu.matmul %317, %319, %cst_85 {dimension_numbers = #tpu.dot_dimension_numbers<[1], [0], [0], [1], [0, 0, 1, 1], [], []>} : vector<128x128xbf16>, vector<128x128xbf16>, vector<128x128xf32> -> vector<128x128xf32>
    %c9 = arith.constant 9 : index
    %c0_86 = arith.constant 0 : index
    %321 = vector.load %arg3[%c9, %c0_86] : memref<16x128xf32, #tpu.memory_space<vmem>>, vector<1x128xf32>
    %322 = vector.shape_cast %321 : vector<1x128xf32> to vector<128xf32>
    %323 = vector.shape_cast %322 : vector<128xf32> to vector<1x128xf32>
    %324 = vector.broadcast %323 : vector<1x128xf32> to vector<128x128xf32>
    %325 = arith.addf %320, %324 : vector<128x128xf32>
    %326 = arith.truncf %325 : vector<128x128xf32> to vector<128x128xbf16>
    %c8_87 = arith.constant 8 : index
    %c0_88 = arith.constant 0 : index
    %c0_89 = arith.constant 0 : index
    %327 = vector.load %arg1[%c8_87, %c0_88, %c0_89] : memref<9x128x128xbf16, #tpu.memory_space<vmem>>, vector<1x128x128xbf16>
    %328 = vector.shape_cast %327 : vector<1x128x128xbf16> to vector<128x128xbf16>
    %cst_90 = arith.constant dense<0.000000e+00> : vector<128x128xf32>
    %329 = tpu.matmul %326, %328, %cst_90 {dimension_numbers = #tpu.dot_dimension_numbers<[1], [0], [0], [1], [0, 0, 1, 1], [], []>} : vector<128x128xbf16>, vector<128x128xbf16>, vector<128x128xf32> -> vector<128x128xf32>
    %c10 = arith.constant 10 : index
    %c0_91 = arith.constant 0 : index
    %330 = vector.load %arg3[%c10, %c0_91] : memref<16x128xf32, #tpu.memory_space<vmem>>, vector<1x128xf32>
    %331 = vector.shape_cast %330 : vector<1x128xf32> to vector<128xf32>
    %332 = vector.shape_cast %331 : vector<128xf32> to vector<1x128xf32>
    %333 = vector.broadcast %332 : vector<1x128xf32> to vector<128x128xf32>
    %334 = arith.addf %329, %333 : vector<128x128xf32>
    %cst_92 = arith.constant 0.000000e+00 : f32
    %335 = vector.broadcast %cst_92 : f32 to vector<128x128xf32>
    %336 = arith.subf %335, %334 : vector<128x128xf32>
    %337 = math.exp %336 : vector<128x128xf32>
    %cst_93 = arith.constant 1.000000e+00 : f32
    %338 = vector.broadcast %cst_93 : f32 to vector<128x128xf32>
    %339 = arith.addf %338, %337 : vector<128x128xf32>
    %340 = tpu.reciprocal %339 {approx = true} : vector<128x128xf32> -> vector<128x128xf32>
    %341 = arith.mulf %334, %340 : vector<128x128xf32>
    %342 = vector.shape_cast %341 : vector<128x128xf32> to vector<2x8x8x128xf32>
    %cst_94 = arith.constant 0.000000e+00 : f32
    %343 = vector.broadcast %cst_94 : f32 to vector<2x8x8x128xf32>
    %344 = arith.select %276, %342, %343 : vector<2x8x8x128xi1>, vector<2x8x8x128xf32>
    %cst_95 = arith.constant dense<0.000000e+00> : vector<2x128xf32>
    %345 = vector.multi_reduction <add>, %344, %cst_95 [1, 2] : vector<2x8x8x128xf32> to vector<2x128xf32>
    %cst_96 = arith.constant 6.250000e-02 : f32
    %346 = vector.broadcast %cst_96 : f32 to vector<2x128xf32>
    %347 = arith.mulf %345, %346 : vector<2x128xf32>
    %c0_97 = arith.constant 0 : index
    %c0_98 = arith.constant 0 : index
    %348 = vector.load %arg4[%c0_97, %c0_98] : memref<2x128xf32, #tpu.memory_space<vmem>>, vector<2x128xf32>
    tpu.vector_store %arg4[%c0_97, %c0_98], %347 {strides = array<i32>} : memref<2x128xf32, #tpu.memory_space<vmem>>, vector<2x128xf32>,
    return
  }
}

</mosaic_0001>

<llo_original>
// kernel: efficientnet_forward.1
$region0: #{efficientnet_forward.1}
  #allocation0 [shape = 'u32[]', space=smem, size = 0x4, offset = 0x4, fixed_abs, tag = 'smem constant byte address 0x4 - core index']
  #allocation1 [shape = 'u32[72,128]{1,0:T(1,128)}', space=vmem, size = 0x9000, scoped, tag = 'internal scratch']
  %s0 = inlined_call_operand.vmem [shape: bf16[128,128], index: 0, kind: input, shape index: {}]
  %s1 = inlined_call_operand.vmem [shape: bf16[9,128,128], index: 1, kind: input, shape index: {}]
  %s2 = inlined_call_operand.vmem [shape: f32[2,9,128], index: 2, kind: input, shape index: {}]
  %s3 = inlined_call_operand.vmem [shape: f32[16,128], index: 3, kind: input, shape index: {}]
  %s4 = inlined_call_operand.hbm [shape: f32[2,128], index: 4, kind: output, shape index: {}]
  %s5 = sld [smem:[#allocation0]]
  $region26: #{efficientnet_forward.1} parent=0
    _
  %s7 = ssub.s32 1, %s5
  %s8 = scalar_select 0, %s7, %s5
  $region1: #{efficientnet_forward.1} parent=0
    #allocation2 [shape = 'u8[1024]{0}', space=vmem, size = 0x400, scoped, tag = 'output window, operand 0, single buffered']
    #allocation3 [shape = 's32[1]{0}', space=sflag, size = 0x4, scoped, tag = 'scoped memory for efficientnet_forward.1']
    %9 = vsyncpa [#allocation3], 0
    // Predicated region
    $region2: #{efficientnet_forward.1} parent=1 // pred_check
      _
    $region3: #{efficientnet_forward.1} parent=1 // pred_check_branch
      %11 = sbr.rel (0) target = $region5
    $region4: #{efficientnet_forward.1} parent=1 // pred_region
      _
    $region5: #{efficientnet_forward.1} parent=1 // pred_fallthru
      _
    // Predicated region
    $region6: #{efficientnet_forward.1} parent=1 // pred_check
      _
    $region7: #{efficientnet_forward.1} parent=1 // pred_check_branch
      %13 = sbr.rel (0) target = $region9
    $region8: #{efficientnet_forward.1} parent=1 // pred_region
      _
    $region9: #{efficientnet_forward.1} parent=1 // pred_fallthru
      _
    // Predicated region
    $region10: #{efficientnet_forward.1} parent=1 // pred_check
      _
    $region11: #{efficientnet_forward.1} parent=1 // pred_check_branch
      %15 = sbr.rel (0) target = $region13
    $region12: #{efficientnet_forward.1} parent=1 // pred_region
      _
    $region13: #{efficientnet_forward.1} parent=1 // pred_fallthru
      _
    // Predicated region
    $region14: #{efficientnet_forward.1} parent=1 // pred_check
      _
    $region15: #{efficientnet_forward.1} parent=1 // pred_check_branch
      %17 = sbr.rel (0) target = $region17
    $region16: #{efficientnet_forward.1} parent=1 // pred_region
      _
    $region17: #{efficientnet_forward.1} parent=1 // pred_fallthru
      _
    %v18 = vld [vmem:[%s0] sm:$0xf]
    %v19 = vld [vmem:[%s0 + $0x4] sm:$0xf]
    %v20 = vld [vmem:[%s0 + $0x8] sm:$0xf]
    %v21 = vld [vmem:[%s0 + $0xc] sm:$0xf]
    %v22 = vld [vmem:[%s0 + $0x10] sm:$0xf]
    %v23 = vld [vmem:[%s0 + $0x14] sm:$0xf]
    %v24 = vld [vmem:[%s0 + $0x18] sm:$0xf]
    %v25 = vld [vmem:[%s0 + $0x1c] sm:$0xf]
    %v26 = vld [vmem:[%s0 + $0x20] sm:$0xf]
    %v27 = vld [vmem:[%s0 + $0x24] sm:$0xf]
    %v28 = vld [vmem:[%s0 + $0x28] sm:$0xf]
    %v29 = vld [vmem:[%s0 + $0x2c] sm:$0xf]
    %v30 = vld [vmem:[%s0 + $0x30] sm:$0xf]
    %v31 = vld [vmem:[%s0 + $0x34] sm:$0xf]
    %v32 = vld [vmem:[%s0 + $0x38] sm:$0xf]
    %v33 = vld [vmem:[%s0 + $0x3c] sm:$0xf]
    %v34 = vld [vmem:[%s1] sm:$0xf]
    %v35 = vld [vmem:[%s1 + $0x4] sm:$0xf]
    %v36 = vld [vmem:[%s1 + $0x8] sm:$0xf]
    %v37 = vld [vmem:[%s1 + $0xc] sm:$0xf]
    %v38 = vld [vmem:[%s1 + $0x10] sm:$0xf]
    %v39 = vld [vmem:[%s1 + $0x14] sm:$0xf]
    %v40 = vld [vmem:[%s1 + $0x18] sm:$0xf]
    %v41 = vld [vmem:[%s1 + $0x1c] sm:$0xf]
    %v42 = vld [vmem:[%s1 + $0x20] sm:$0xf]
    %v43 = vld [vmem:[%s1 + $0x24] sm:$0xf]
    %v44 = vld [vmem:[%s1 + $0x28] sm:$0xf]
    %v45 = vld [vmem:[%s1 + $0x2c] sm:$0xf]
    %v46 = vld [vmem:[%s1 + $0x30] sm:$0xf]
    %v47 = vld [vmem:[%s1 + $0x34] sm:$0xf]
    %v48 = vld [vmem:[%s1 + $0x38] sm:$0xf]
    %v49 = vld [vmem:[%s1 + $0x3c] sm:$0xf]
    %v50 = vld [vmem:[%s3] sm:$0x1]
    %v51 = vperm.slane %v50, 0
    %v68 = vunpack.c.l.b16 %v18
    %v69 = vunpack.c.l.b16 %v19
    %v70 = vunpack.c.l.b16 %v20
    %v71 = vunpack.c.l.b16 %v21
    %v72 = vunpack.c.l.b16 %v22
    %v73 = vunpack.c.l.b16 %v23
    %v74 = vunpack.c.l.b16 %v24
    %v75 = vunpack.c.l.b16 %v25
    %v76 = vunpack.c.l.b16 %v26
    %v77 = vunpack.c.l.b16 %v27
    %v78 = vunpack.c.l.b16 %v28
    %v79 = vunpack.c.l.b16 %v29
    %v80 = vunpack.c.l.b16 %v30
    %v81 = vunpack.c.l.b16 %v31
    %v82 = vunpack.c.l.b16 %v32
    %v83 = vunpack.c.l.b16 %v33
    %v84 = vpack.c.b16 %v69, %v68
    %v85 = vpack.c.b16 %v71, %v70
    %v86 = vpack.c.b16 %v73, %v72
    %v87 = vpack.c.b16 %v75, %v74
    %v88 = vpack.c.b16 %v77, %v76
    %v89 = vpack.c.b16 %v79, %v78
    %v90 = vpack.c.b16 %v81, %v80
    %v91 = vpack.c.b16 %v83, %v82
    %v116 = vunpack.c.l.b16 %v34
    %v117 = vunpack.c.l.b16 %v35
    %v118 = vunpack.c.l.b16 %v36
    %v119 = vunpack.c.l.b16 %v37
    %v120 = vunpack.c.l.b16 %v38
    %v121 = vunpack.c.l.b16 %v39
    %v122 = vunpack.c.l.b16 %v40
    %v123 = vunpack.c.l.b16 %v41
    %v124 = vunpack.c.l.b16 %v42
    %v125 = vunpack.c.l.b16 %v43
    %v126 = vunpack.c.l.b16 %v44
    %v127 = vunpack.c.l.b16 %v45
    %v128 = vunpack.c.l.b16 %v46
    %v129 = vunpack.c.l.b16 %v47
    %v130 = vunpack.c.l.b16 %v48
    %v131 = vunpack.c.l.b16 %v49
    %v132 = vpack.c.b16 %v117, %v116
    %v133 = vpack.c.b16 %v119, %v118
    %v134 = vpack.c.b16 %v121, %v120
    %v135 = vpack.c.b16 %v123, %v122
    %v136 = vpack.c.b16 %v125, %v124
    %v137 = vpack.c.b16 %v127, %v126
    %v138 = vpack.c.b16 %v129, %v128
    %v139 = vpack.c.b16 %v131, %v130
    %148 = vmatpush.bf16.msra.mxu0 %v139
    %149 = vmatpush.bf16.msra.mxu0 %v138
    %150 = vmatpush.bf16.msra.mxu0 %v137
    %151 = vmatpush.bf16.msra.mxu0 %v136
    %152 = vmatpush.bf16.msra.mxu0 %v135
    %153 = vmatpush.bf16.msra.mxu0 %v134
    %154 = vmatpush.bf16.msra.mxu0 %v133
    %155 = vmatpush.bf16.msra.mxu0 %v132
    %156 = vmatmul.bf16.gmra.mxu0 %v84
    %v157 = vpop.f32.mrf.mxu0
    %v158 = vadd.f32 %v51, %v157
    %v159 = vpop.f32.mrf.mxu0
    %v160 = vadd.f32 %v51, %v159
    %161 = vmatmul.bf16.gmra.mxu0 %v85
    %v162 = vpop.f32.mrf.mxu0
    %v163 = vadd.f32 %v51, %v162
    %v164 = vpop.f32.mrf.mxu0
    %v165 = vadd.f32 %v51, %v164
    %166 = vmatmul.bf16.gmra.mxu0 %v86
    %v167 = vpop.f32.mrf.mxu0
    %v168 = vadd.f32 %v51, %v167
    %v169 = vpop.f32.mrf.mxu0
    %v170 = vadd.f32 %v51, %v169
    %171 = vmatmul.bf16.gmra.mxu0 %v87
    %v172 = vpop.f32.mrf.mxu0
    %v173 = vadd.f32 %v51, %v172
    %v174 = vpop.f32.mrf.mxu0
    %v175 = vadd.f32 %v51, %v174
    %176 = vmatmul.bf16.gmra.mxu0 %v88
    %v177 = vpop.f32.mrf.mxu0
    %v178 = vadd.f32 %v51, %v177
    %v179 = vpop.f32.mrf.mxu0
    %v180 = vadd.f32 %v51, %v179
    %181 = vmatmul.bf16.gmra.mxu0 %v89
    %v182 = vpop.f32.mrf.mxu0
    %v183 = vadd.f32 %v51, %v182
    %v184 = vpop.f32.mrf.mxu0
    %v185 = vadd.f32 %v51, %v184
    %186 = vmatmul.bf16.gmra.mxu0 %v90
    %v187 = vpop.f32.mrf.mxu0
    %v188 = vadd.f32 %v51, %v187
    %v189 = vpop.f32.mrf.mxu0
    %v190 = vadd.f32 %v51, %v189
    %191 = vmatmul.bf16.gmra.mxu0 %v91
    %v192 = vpop.f32.mrf.mxu0
    %v193 = vadd.f32 %v51, %v192
    %v194 = vpop.f32.mrf.mxu0
    %v195 = vadd.f32 %v51, %v194
    %196 = vdwg.mxu0
    %v197 = vsub.f32 0.0, %v158
    %v198 = vsub.f32 0.0, %v160
    %v199 = vsub.f32 0.0, %v163
    %v200 = vsub.f32 0.0, %v165
    %v201 = vsub.f32 0.0, %v168
    %v202 = vsub.f32 0.0, %v170
    %v203 = vsub.f32 0.0, %v173
    %v204 = vsub.f32 0.0, %v175
    %v205 = vsub.f32 0.0, %v178
    %v206 = vsub.f32 0.0, %v180
    %v207 = vsub.f32 0.0, %v183
    %v208 = vsub.f32 0.0, %v185
    %v209 = vsub.f32 0.0, %v188
    %v210 = vsub.f32 0.0, %v190
    %v211 = vsub.f32 0.0, %v193
    %v212 = vsub.f32 0.0, %v195
    %v213 = vmul.f32 %v197, 1.442695
    %v214 = vpow.pop %v213
    %v215 = vmul.f32 %v198, 1.442695
    %v216 = vpow.pop %v215
    %v217 = vmul.f32 %v199, 1.442695
    %v218 = vpow.pop %v217
    %v219 = vmul.f32 %v200, 1.442695
    %v220 = vpow.pop %v219
    %v221 = vmul.f32 %v201, 1.442695
    %v222 = vpow.pop %v221
    %v223 = vmul.f32 %v202, 1.442695
    %v224 = vpow.pop %v223
    %v225 = vmul.f32 %v203, 1.442695
    %v226 = vpow.pop %v225
    %v227 = vmul.f32 %v204, 1.442695
    %v228 = vpow.pop %v227
    %v229 = vmul.f32 %v205, 1.442695
    %v230 = vpow.pop %v229
    %v231 = vmul.f32 %v206, 1.442695
    %v232 = vpow.pop %v231
    %v233 = vmul.f32 %v207, 1.442695
    %v234 = vpow.pop %v233
    %v235 = vmul.f32 %v208, 1.442695
    %v236 = vpow.pop %v235
    %v237 = vmul.f32 %v209, 1.442695
    %v238 = vpow.pop %v237
    %v239 = vmul.f32 %v210, 1.442695
    %v240 = vpow.pop %v239
    %v241 = vmul.f32 %v211, 1.442695
    %v242 = vpow.pop %v241
    %v243 = vmul.f32 %v212, 1.442695
    %v244 = vpow.pop %v243
    %v245 = vadd.f32 %v214, 1.0
    %v246 = vadd.f32 %v216, 1.0
    %v247 = vadd.f32 %v218, 1.0
    %v248 = vadd.f32 %v220, 1.0
    %v249 = vadd.f32 %v222, 1.0
    %v250 = vadd.f32 %v224, 1.0
    %v251 = vadd.f32 %v226, 1.0
    %v252 = vadd.f32 %v228, 1.0
    %v253 = vadd.f32 %v230, 1.0
    %v254 = vadd.f32 %v232, 1.0
    %v255 = vadd.f32 %v234, 1.0
    %v256 = vadd.f32 %v236, 1.0
    %v257 = vadd.f32 %v238, 1.0
    %v258 = vadd.f32 %v240, 1.0
    %v259 = vadd.f32 %v242, 1.0
    %v260 = vadd.f32 %v244, 1.0
    %v261 = vrcp.pop %v245
    %v262 = vrcp.pop %v246
    %v263 = vrcp.pop %v247
    %v264 = vrcp.pop %v248
    %v265 = vrcp.pop %v249
    %v266 = vrcp.pop %v250
    %v267 = vrcp.pop %v251
    %v268 = vrcp.pop %v252
    %v269 = vrcp.pop %v253
    %v270 = vrcp.pop %v254
    %v271 = vrcp.pop %v255
    %v272 = vrcp.pop %v256
    %v273 = vrcp.pop %v257
    %v274 = vrcp.pop %v258
    %v275 = vrcp.pop %v259
    %v276 = vrcp.pop %v260
    %v277 = vmul.f32 %v158, %v261
    %v278 = vmul.f32 %v160, %v262
    %v279 = vmul.f32 %v163, %v263
    %v280 = vmul.f32 %v165, %v264
    %v281 = vmul.f32 %v168, %v265
    %v282 = vmul.f32 %v170, %v266
    %v283 = vmul.f32 %v173, %v267
    %v284 = vmul.f32 %v175, %v268
    %v285 = vmul.f32 %v178, %v269
    %v286 = vmul.f32 %v180, %v270
    %v287 = vmul.f32 %v183, %v271
    %v288 = vmul.f32 %v185, %v272
    %v289 = vmul.f32 %v188, %v273
    %v290 = vmul.f32 %v190, %v274
    %v291 = vmul.f32 %v193, %v275
    %v292 = vmul.f32 %v195, %v276
    %v293 = vld [vmem:[%s2] sm:$0xff]
    %v294 = vld [vmem:[%s2 + $0x8] sm:$0x1]
    %v311 = vrot.slane %v277, 7
    %v312 = vrot.slane %v278, 7
    %v313 = vrot.slane %v279, 7
    %v314 = vrot.slane %v280, 7
    %v315 = vrot.slane %v281, 7
    %v316 = vrot.slane %v282, 7
    %v317 = vrot.slane %v283, 7
    %v318 = vrot.slane %v284, 7
    %v319 = vrot.slane %v285, 7
    %v320 = vrot.slane %v286, 7
    %v321 = vrot.slane %v287, 7
    %v322 = vrot.slane %v288, 7
    %v323 = vrot.slane %v289, 7
    %v324 = vrot.slane %v290, 7
    %v325 = vrot.slane %v291, 7
    %v326 = vrot.slane %v292, 7
    %vm343 = vcmask 1040384
    %v344 = vsel %vm343, 0.0, %v311
    %v345 = vsel %vm343, 0.0, %v312
    %v346 = vsel %vm343, 0.0, %v313
    %v347 = vsel %vm343, 0.0, %v314
    %v348 = vsel %vm343, 0.0, %v315
    %v349 = vsel %vm343, 0.0, %v316
    %v350 = vsel %vm343, 0.0, %v317
    %v351 = vsel %vm343, 0.0, %v318
    %v352 = vsel %vm343, 0.0, %v319
    %v353 = vsel %vm343, 0.0, %v320
    %v354 = vsel %vm343, 0.0, %v321
    %v355 = vsel %vm343, 0.0, %v322
    %v356 = vsel %vm343, 0.0, %v323
    %v357 = vsel %vm343, 0.0, %v324
    %v358 = vsel %vm343, 0.0, %v325
    %v359 = vsel %vm343, 0.0, %v326
    %v360 = vsel %vm343, %v311, 0.0
    %v361 = vsel %vm343, %v312, 0.0
    %v362 = vsel %vm343, %v313, 0.0
    %v363 = vsel %vm343, %v314, 0.0
    %v364 = vsel %vm343, %v315, 0.0
    %v365 = vsel %vm343, %v316, 0.0
    %v366 = vsel %vm343, %v317, 0.0
    %v367 = vsel %vm343, %v318, 0.0
    %v368 = vsel %vm343, %v319, 0.0
    %v369 = vsel %vm343, %v320, 0.0
    %v370 = vsel %vm343, %v321, 0.0
    %v371 = vsel %vm343, %v322, 0.0
    %v372 = vsel %vm343, %v323, 0.0
    %v373 = vsel %vm343, %v324, 0.0
    %v374 = vsel %vm343, %v325, 0.0
    %v375 = vsel %vm343, %v326, 0.0
    %v376 = vperm.slane %v293, 0
    %v377 = vmul.f32 %v376, 0.0
    %v378 = vmul.f32 %v344, %v376
    %v379 = vmul.f32 %v345, %v376
    %v380 = vmul.f32 %v346, %v376
    %v381 = vmul.f32 %v347, %v376
    %v382 = vmul.f32 %v348, %v376
    %v383 = vmul.f32 %v349, %v376
    %v384 = vmul.f32 %v350, %v376
    %v385 = vmul.f32 %v352, %v376
    %v386 = vmul.f32 %v353, %v376
    %v387 = vmul.f32 %v354, %v376
    %v388 = vmul.f32 %v355, %v376
    %v389 = vmul.f32 %v356, %v376
    %v390 = vmul.f32 %v357, %v376
    %v391 = vmul.f32 %v358, %v376
    %v392 = vadd.f32 %v377, 0.0
    %v393 = vadd.f32 %v378, 0.0
    %v394 = vadd.f32 %v379, 0.0
    %v395 = vadd.f32 %v380, 0.0
    %v396 = vadd.f32 %v381, 0.0
    %v397 = vadd.f32 %v382, 0.0
    %v398 = vadd.f32 %v383, 0.0
    %v399 = vadd.f32 %v384, 0.0
    %v400 = vadd.f32 %v385, 0.0
    %v401 = vadd.f32 %v386, 0.0
    %v402 = vadd.f32 %v387, 0.0
    %v403 = vadd.f32 %v388, 0.0
    %v404 = vadd.f32 %v389, 0.0
    %v405 = vadd.f32 %v390, 0.0
    %v406 = vadd.f32 %v391, 0.0
    %v407 = vperm.slane %v293, 3
    %v408 = vmul.f32 %v344, %v407
    %v409 = vmul.f32 %v345, %v407
    %v410 = vmul.f32 %v346, %v407
    %v411 = vmul.f32 %v347, %v407
    %v412 = vmul.f32 %v348, %v407
    %v413 = vmul.f32 %v349, %v407
    %v414 = vmul.f32 %v350, %v407
    %v415 = vmul.f32 %v351, %v407
    %v416 = vmul.f32 %v352, %v407
    %v417 = vmul.f32 %v353, %v407
    %v418 = vmul.f32 %v354, %v407
    %v419 = vmul.f32 %v355, %v407
    %v420 = vmul.f32 %v356, %v407
    %v421 = vmul.f32 %v357, %v407
    %v422 = vmul.f32 %v358, %v407
    %v423 = vmul.f32 %v359, %v407
    %v424 = vadd.f32 %v392, %v408
    %v425 = vadd.f32 %v393, %v409
    %v426 = vadd.f32 %v394, %v410
    %v427 = vadd.f32 %v395, %v411
    %v428 = vadd.f32 %v396, %v412
    %v429 = vadd.f32 %v397, %v413
    %v430 = vadd.f32 %v398, %v414
    %v431 = vadd.f32 %v399, %v415
    %v432 = vadd.f32 %v392, %v416
    %v433 = vadd.f32 %v400, %v417
    %v434 = vadd.f32 %v401, %v418
    %v435 = vadd.f32 %v402, %v419
    %v436 = vadd.f32 %v403, %v420
    %v437 = vadd.f32 %v404, %v421
    %v438 = vadd.f32 %v405, %v422
    %v439 = vadd.f32 %v406, %v423
    %v440 = vperm.slane %v293, 6
    %v441 = vmul.f32 %v345, %v440
    %v442 = vmul.f32 %v346, %v440
    %v443 = vmul.f32 %v347, %v440
    %v444 = vmul.f32 %v348, %v440
    %v445 = vmul.f32 %v349, %v440
    %v446 = vmul.f32 %v350, %v440
    %v447 = vmul.f32 %v351, %v440
    %v448 = vmul.f32 %v440, 0.0
    %v449 = vmul.f32 %v353, %v440
    %v450 = vmul.f32 %v354, %v440
    %v451 = vmul.f32 %v355, %v440
    %v452 = vmul.f32 %v356, %v440
    %v453 = vmul.f32 %v357, %v440
    %v454 = vmul.f32 %v358, %v440
    %v455 = vmul.f32 %v359, %v440
    %v456 = vadd.f32 %v424, %v441
    %v457 = vadd.f32 %v425, %v442
    %v458 = vadd.f32 %v426, %v443
    %v459 = vadd.f32 %v427, %v444
    %v460 = vadd.f32 %v428, %v445
    %v461 = vadd.f32 %v429, %v446
    %v462 = vadd.f32 %v430, %v447
    %v463 = vadd.f32 %v431, %v448
    %v464 = vadd.f32 %v432, %v449
    %v465 = vadd.f32 %v433, %v450
    %v466 = vadd.f32 %v434, %v451
    %v467 = vadd.f32 %v435, %v452
    %v468 = vadd.f32 %v436, %v453
    %v469 = vadd.f32 %v437, %v454
    %v470 = vadd.f32 %v438, %v455
    %v471 = vadd.f32 %v439, %v448
    %vm504 = vcmask 1046528
    %v505 = vrot.slane %v344, 1
    %v506 = vrot.slane %v360, 1
    %v507 = vsel %vm504, %v505, %v506
    %v508 = vrot.slane %v345, 1
    %v509 = vrot.slane %v361, 1
    %v510 = vsel %vm504, %v508, %v509
    %v511 = vrot.slane %v346, 1
    %v512 = vrot.slane %v362, 1
    %v513 = vsel %vm504, %v511, %v512
    %v514 = vrot.slane %v347, 1
    %v515 = vrot.slane %v363, 1
    %v516 = vsel %vm504, %v514, %v515
    %v517 = vrot.slane %v348, 1
    %v518 = vrot.slane %v364, 1
    %v519 = vsel %vm504, %v517, %v518
    %v520 = vrot.slane %v349, 1
    %v521 = vrot.slane %v365, 1
    %v522 = vsel %vm504, %v520, %v521
    %v523 = vrot.slane %v350, 1
    %v524 = vrot.slane %v366, 1
    %v525 = vsel %vm504, %v523, %v524
    %v526 = vrot.slane %v351, 1
    %v527 = vrot.slane %v367, 1
    %v528 = vsel %vm504, %v526, %v527
    %v529 = vrot.slane %v352, 1
    %v530 = vrot.slane %v368, 1
    %v531 = vsel %vm504, %v529, %v530
    %v532 = vrot.slane %v353, 1
    %v533 = vrot.slane %v369, 1
    %v534 = vsel %vm504, %v532, %v533
    %v535 = vrot.slane %v354, 1
    %v536 = vrot.slane %v370, 1
    %v537 = vsel %vm504, %v535, %v536
    %v538 = vrot.slane %v355, 1
    %v539 = vrot.slane %v371, 1
    %v540 = vsel %vm504, %v538, %v539
    %v541 = vrot.slane %v356, 1
    %v542 = vrot.slane %v372, 1
    %v543 = vsel %vm504, %v541, %v542
    %v544 = vrot.slane %v357, 1
    %v545 = vrot.slane %v373, 1
    %v546 = vsel %vm504, %v544, %v545
    %v547 = vrot.slane %v358, 1
    %v548 = vrot.slane %v374, 1
    %v549 = vsel %vm504, %v547, %v548
    %v550 = vrot.slane %v359, 1
    %v551 = vrot.slane %v375, 1
    %v552 = vsel %vm504, %v550, %v551
    %v569 = vperm.slane %v293, 1
    %v570 = vmul.f32 %v569, 0.0
    %v571 = vmul.f32 %v507, %v569
    %v572 = vmul.f32 %v510, %v569
    %v573 = vmul.f32 %v513, %v569
    %v574 = vmul.f32 %v516, %v569
    %v575 = vmul.f32 %v519, %v569
    %v576 = vmul.f32 %v522, %v569
    %v577 = vmul.f32 %v525, %v569
    %v578 = vmul.f32 %v531, %v569
    %v579 = vmul.f32 %v534, %v569
    %v580 = vmul.f32 %v537, %v569
    %v581 = vmul.f32 %v540, %v569
    %v582 = vmul.f32 %v543, %v569
    %v583 = vmul.f32 %v546, %v569
    %v584 = vmul.f32 %v549, %v569
    %v585 = vadd.f32 %v456, %v570
    %v586 = vadd.f32 %v457, %v571
    %v587 = vadd.f32 %v458, %v572
    %v588 = vadd.f32 %v459, %v573
    %v589 = vadd.f32 %v460, %v574
    %v590 = vadd.f32 %v461, %v575
    %v591 = vadd.f32 %v462, %v576
    %v592 = vadd.f32 %v463, %v577
    %v593 = vadd.f32 %v464, %v570
    %v594 = vadd.f32 %v465, %v578
    %v595 = vadd.f32 %v466, %v579
    %v596 = vadd.f32 %v467, %v580
    %v597 = vadd.f32 %v468, %v581
    %v598 = vadd.f32 %v469, %v582
    %v599 = vadd.f32 %v470, %v583
    %v600 = vadd.f32 %v471, %v584
    %v601 = vperm.slane %v293, 4
    %v602 = vmul.f32 %v507, %v601
    %v603 = vmul.f32 %v510, %v601
    %v604 = vmul.f32 %v513, %v601
    %v605 = vmul.f32 %v516, %v601
    %v606 = vmul.f32 %v519, %v601
    %v607 = vmul.f32 %v522, %v601
    %v608 = vmul.f32 %v525, %v601
    %v609 = vmul.f32 %v528, %v601
    %v610 = vmul.f32 %v531, %v601
    %v611 = vmul.f32 %v534, %v601
    %v612 = vmul.f32 %v537, %v601
    %v613 = vmul.f32 %v540, %v601
    %v614 = vmul.f32 %v543, %v601
    %v615 = vmul.f32 %v546, %v601
    %v616 = vmul.f32 %v549, %v601
    %v617 = vmul.f32 %v552, %v601
    %v618 = vadd.f32 %v585, %v602
    %v619 = vadd.f32 %v586, %v603
    %v620 = vadd.f32 %v587, %v604
    %v621 = vadd.f32 %v588, %v605
    %v622 = vadd.f32 %v589, %v606
    %v623 = vadd.f32 %v590, %v607
    %v624 = vadd.f32 %v591, %v608
    %v625 = vadd.f32 %v592, %v609
    %v626 = vadd.f32 %v593, %v610
    %v627 = vadd.f32 %v594, %v611
    %v628 = vadd.f32 %v595, %v612
    %v629 = vadd.f32 %v596, %v613
    %v630 = vadd.f32 %v597, %v614
    %v631 = vadd.f32 %v598, %v615
    %v632 = vadd.f32 %v599, %v616
    %v633 = vadd.f32 %v600, %v617
    %v634 = vperm.slane %v293, 7
    %v635 = vmul.f32 %v510, %v634
    %v636 = vmul.f32 %v513, %v634
    %v637 = vmul.f32 %v516, %v634
    %v638 = vmul.f32 %v519, %v634
    %v639 = vmul.f32 %v522, %v634
    %v640 = vmul.f32 %v525, %v634
    %v641 = vmul.f32 %v528, %v634
    %v642 = vmul.f32 %v634, 0.0
    %v643 = vmul.f32 %v534, %v634
    %v644 = vmul.f32 %v537, %v634
    %v645 = vmul.f32 %v540, %v634
    %v646 = vmul.f32 %v543, %v634
    %v647 = vmul.f32 %v546, %v634
    %v648 = vmul.f32 %v549, %v634
    %v649 = vmul.f32 %v552, %v634
    %v650 = vadd.f32 %v618, %v635
    %v651 = vadd.f32 %v619, %v636
    %v652 = vadd.f32 %v620, %v637
    %v653 = vadd.f32 %v621, %v638
    %v654 = vadd.f32 %v622, %v639
    %v655 = vadd.f32 %v623, %v640
    %v656 = vadd.f32 %v624, %v641
    %v657 = vadd.f32 %v625, %v642
    %v658 = vadd.f32 %v626, %v643
    %v659 = vadd.f32 %v627, %v644
    %v660 = vadd.f32 %v628, %v645
    %v661 = vadd.f32 %v629, %v646
    %v662 = vadd.f32 %v630, %v647
    %v663 = vadd.f32 %v631, %v648
    %v664 = vadd.f32 %v632, %v649
    %v665 = vadd.f32 %v633, %v642
    %vm666 = vcmask 1045504
    %v667 = vrot.slane %v344, 2
    %v668 = vrot.slane %v360, 2
    %v669 = vsel %vm666, %v667, %v668
    %v670 = vrot.slane %v345, 2
    %v671 = vrot.slane %v361, 2
    %v672 = vsel %vm666, %v670, %v671
    %v673 = vrot.slane %v346, 2
    %v674 = vrot.slane %v362, 2
    %v675 = vsel %vm666, %v673, %v674
    %v676 = vrot.slane %v347, 2
    %v677 = vrot.slane %v363, 2
    %v678 = vsel %vm666, %v676, %v677
    %v679 = vrot.slane %v348, 2
    %v680 = vrot.slane %v364, 2
    %v681 = vsel %vm666, %v679, %v680
    %v682 = vrot.slane %v349, 2
    %v683 = vrot.slane %v365, 2
    %v684 = vsel %vm666, %v682, %v683
    %v685 = vrot.slane %v350, 2
    %v686 = vrot.slane %v366, 2
    %v687 = vsel %vm666, %v685, %v686
    %v688 = vrot.slane %v351, 2
    %v689 = vrot.slane %v367, 2
    %v690 = vsel %vm666, %v688, %v689
    %v691 = vrot.slane %v352, 2
    %v692 = vrot.slane %v368, 2
    %v693 = vsel %vm666, %v691, %v692
    %v694 = vrot.slane %v353, 2
    %v695 = vrot.slane %v369, 2
    %v696 = vsel %vm666, %v694, %v695
    %v697 = vrot.slane %v354, 2
    %v698 = vrot.slane %v370, 2
    %v699 = vsel %vm666, %v697, %v698
    %v700 = vrot.slane %v355, 2
    %v701 = vrot.slane %v371, 2
    %v702 = vsel %vm666, %v700, %v701
    %v703 = vrot.slane %v356, 2
    %v704 = vrot.slane %v372, 2
    %v705 = vsel %vm666, %v703, %v704
    %v706 = vrot.slane %v357, 2
    %v707 = vrot.slane %v373, 2
    %v708 = vsel %vm666, %v706, %v707
    %v709 = vrot.slane %v358, 2
    %v710 = vrot.slane %v374, 2
    %v711 = vsel %vm666, %v709, %v710
    %v712 = vrot.slane %v359, 2
    %v713 = vrot.slane %v375, 2
    %v714 = vsel %vm666, %v712, %v713
    %v731 = vperm.slane %v293, 2
    %v732 = vmul.f32 %v731, 0.0
    %v733 = vmul.f32 %v669, %v731
    %v734 = vmul.f32 %v672, %v731
    %v735 = vmul.f32 %v675, %v731
    %v736 = vmul.f32 %v678, %v731
    %v737 = vmul.f32 %v681, %v731
    %v738 = vmul.f32 %v684, %v731
    %v739 = vmul.f32 %v687, %v731
    %v740 = vmul.f32 %v693, %v731
    %v741 = vmul.f32 %v696, %v731
    %v742 = vmul.f32 %v699, %v731
    %v743 = vmul.f32 %v702, %v731
    %v744 = vmul.f32 %v705, %v731
    %v745 = vmul.f32 %v708, %v731
    %v746 = vmul.f32 %v711, %v731
    %v747 = vadd.f32 %v650, %v732
    %v748 = vadd.f32 %v651, %v733
    %v749 = vadd.f32 %v652, %v734
    %v750 = vadd.f32 %v653, %v735
    %v751 = vadd.f32 %v654, %v736
    %v752 = vadd.f32 %v655, %v737
    %v753 = vadd.f32 %v656, %v738
    %v754 = vadd.f32 %v657, %v739
    %v755 = vadd.f32 %v658, %v732
    %v756 = vadd.f32 %v659, %v740
    %v757 = vadd.f32 %v660, %v741
    %v758 = vadd.f32 %v661, %v742
    %v759 = vadd.f32 %v662, %v743
    %v760 = vadd.f32 %v663, %v744
    %v761 = vadd.f32 %v664, %v745
    %v762 = vadd.f32 %v665, %v746
    %v763 = vperm.slane %v293, 5
    %v764 = vmul.f32 %v669, %v763
    %v765 = vmul.f32 %v672, %v763
    %v766 = vmul.f32 %v675, %v763
    %v767 = vmul.f32 %v678, %v763
    %v768 = vmul.f32 %v681, %v763
    %v769 = vmul.f32 %v684, %v763
    %v770 = vmul.f32 %v687, %v763
    %v771 = vmul.f32 %v690, %v763
    %v772 = vmul.f32 %v693, %v763
    %v773 = vmul.f32 %v696, %v763
    %v774 = vmul.f32 %v699, %v763
    %v775 = vmul.f32 %v702, %v763
    %v776 = vmul.f32 %v705, %v763
    %v777 = vmul.f32 %v708, %v763
    %v778 = vmul.f32 %v711, %v763
    %v779 = vmul.f32 %v714, %v763
    %v780 = vadd.f32 %v747, %v764
    %v781 = vadd.f32 %v748, %v765
    %v782 = vadd.f32 %v749, %v766
    %v783 = vadd.f32 %v750, %v767
    %v784 = vadd.f32 %v751, %v768
    %v785 = vadd.f32 %v752, %v769
    %v786 = vadd.f32 %v753, %v770
    %v787 = vadd.f32 %v754, %v771
    %v788 = vadd.f32 %v755, %v772
    %v789 = vadd.f32 %v756, %v773
    %v790 = vadd.f32 %v757, %v774
    %v791 = vadd.f32 %v758, %v775
    %v792 = vadd.f32 %v759, %v776
    %v793 = vadd.f32 %v760, %v777
    %v794 = vadd.f32 %v761, %v778
    %v795 = vadd.f32 %v762, %v779
    %v796 = vperm.slane %v294, 0
    %v797 = vmul.f32 %v672, %v796
    %v798 = vmul.f32 %v675, %v796
    %v799 = vmul.f32 %v678, %v796
    %v800 = vmul.f32 %v681, %v796
    %v801 = vmul.f32 %v684, %v796
    %v802 = vmul.f32 %v687, %v796
    %v803 = vmul.f32 %v690, %v796
    %v804 = vmul.f32 %v796, 0.0
    %v805 = vmul.f32 %v696, %v796
    %v806 = vmul.f32 %v699, %v796
    %v807 = vmul.f32 %v702, %v796
    %v808 = vmul.f32 %v705, %v796
    %v809 = vmul.f32 %v708, %v796
    %v810 = vmul.f32 %v711, %v796
    %v811 = vmul.f32 %v714, %v796
    %v812 = vadd.f32 %v780, %v797
    %v813 = vadd.f32 %v781, %v798
    %v814 = vadd.f32 %v782, %v799
    %v815 = vadd.f32 %v783, %v800
    %v816 = vadd.f32 %v784, %v801
    %v817 = vadd.f32 %v785, %v802
    %v818 = vadd.f32 %v786, %v803
    %v819 = vadd.f32 %v787, %v804
    %v820 = vadd.f32 %v788, %v805
    %v821 = vadd.f32 %v789, %v806
    %v822 = vadd.f32 %v790, %v807
    %v823 = vadd.f32 %v791, %v808
    %v824 = vadd.f32 %v792, %v809
    %v825 = vadd.f32 %v793, %v810
    %v826 = vadd.f32 %v794, %v811
    %v827 = vadd.f32 %v795, %v804
    %v828 = vld [vmem:[%s3 + $0x1] sm:$0x1]
    %v829 = vperm.slane %v828, 0
    %v830 = vadd.f32 %v812, %v829
    %v831 = vadd.f32 %v813, %v829
    %v832 = vadd.f32 %v814, %v829
    %v833 = vadd.f32 %v815, %v829
    %v834 = vadd.f32 %v816, %v829
    %v835 = vadd.f32 %v817, %v829
    %v836 = vadd.f32 %v818, %v829
    %v837 = vadd.f32 %v819, %v829
    %v838 = vadd.f32 %v820, %v829
    %v839 = vadd.f32 %v821, %v829
    %v840 = vadd.f32 %v822, %v829
    %v841 = vadd.f32 %v823, %v829
    %v842 = vadd.f32 %v824, %v829
    %v843 = vadd.f32 %v825, %v829
    %v844 = vadd.f32 %v826, %v829
    %v845 = vadd.f32 %v827, %v829
    %v846 = vsub.f32 0.0, %v830
    %v847 = vsub.f32 0.0, %v831
    %v848 = vsub.f32 0.0, %v832
    %v849 = vsub.f32 0.0, %v833
    %v850 = vsub.f32 0.0, %v834
    %v851 = vsub.f32 0.0, %v835
    %v852 = vsub.f32 0.0, %v836
    %v853 = vsub.f32 0.0, %v837
    %v854 = vsub.f32 0.0, %v838
    %v855 = vsub.f32 0.0, %v839
    %v856 = vsub.f32 0.0, %v840
    %v857 = vsub.f32 0.0, %v841
    %v858 = vsub.f32 0.0, %v842
    %v859 = vsub.f32 0.0, %v843
    %v860 = vsub.f32 0.0, %v844
    %v861 = vsub.f32 0.0, %v845
    %v862 = vmul.f32 %v846, 1.442695
    %v863 = vpow.pop %v862
    %v864 = vmul.f32 %v847, 1.442695
    %v865 = vpow.pop %v864
    %v866 = vmul.f32 %v848, 1.442695
    %v867 = vpow.pop %v866
    %v868 = vmul.f32 %v849, 1.442695
    %v869 = vpow.pop %v868
    %v870 = vmul.f32 %v850, 1.442695
    %v871 = vpow.pop %v870
    %v872 = vmul.f32 %v851, 1.442695
    %v873 = vpow.pop %v872
    %v874 = vmul.f32 %v852, 1.442695
    %v875 = vpow.pop %v874
    %v876 = vmul.f32 %v853, 1.442695
    %v877 = vpow.pop %v876
    %v878 = vmul.f32 %v854, 1.442695
    %v879 = vpow.pop %v878
    %v880 = vmul.f32 %v855, 1.442695
    %v881 = vpow.pop %v880
    %v882 = vmul.f32 %v856, 1.442695
    %v883 = vpow.pop %v882
    %v884 = vmul.f32 %v857, 1.442695
    %v885 = vpow.pop %v884
    %v886 = vmul.f32 %v858, 1.442695
    %v887 = vpow.pop %v886
    %v888 = vmul.f32 %v859, 1.442695
    %v889 = vpow.pop %v888
    %v890 = vmul.f32 %v860, 1.442695
    %v891 = vpow.pop %v890
    %v892 = vmul.f32 %v861, 1.442695
    %v893 = vpow.pop %v892
    %v894 = vadd.f32 %v863, 1.0
    %v895 = vadd.f32 %v865, 1.0
    %v896 = vadd.f32 %v867, 1.0
    %v897 = vadd.f32 %v869, 1.0
    %v898 = vadd.f32 %v871, 1.0
    %v899 = vadd.f32 %v873, 1.0
    %v900 = vadd.f32 %v875, 1.0
    %v901 = vadd.f32 %v877, 1.0
    %v902 = vadd.f32 %v879, 1.0
    %v903 = vadd.f32 %v881, 1.0
    %v904 = vadd.f32 %v883, 1.0
    %v905 = vadd.f32 %v885, 1.0
    %v906 = vadd.f32 %v887, 1.0
    %v907 = vadd.f32 %v889, 1.0
    %v908 = vadd.f32 %v891, 1.0
    %v909 = vadd.f32 %v893, 1.0
    %v910 = vrcp.pop %v894
    %v911 = vrcp.pop %v895
    %v912 = vrcp.pop %v896
    %v913 = vrcp.pop %v897
    %v914 = vrcp.pop %v898
    %v915 = vrcp.pop %v899
    %v916 = vrcp.pop %v900
    %v917 = vrcp.pop %v901
    %v918 = vrcp.pop %v902
    %v919 = vrcp.pop %v903
    %v920 = vrcp.pop %v904
    %v921 = vrcp.pop %v905
    %v922 = vrcp.pop %v906
    %v923 = vrcp.pop %v907
    %v924 = vrcp.pop %v908
    %v925 = vrcp.pop %v909
    %v926 = vmul.f32 %v830, %v910
    %v927 = vmul.f32 %v831, %v911
    %v928 = vmul.f32 %v832, %v912
    %v929 = vmul.f32 %v833, %v913
    %v930 = vmul.f32 %v834, %v914
    %v931 = vmul.f32 %v835, %v915
    %v932 = vmul.f32 %v836, %v916
    %v933 = vmul.f32 %v837, %v917
    %v934 = vmul.f32 %v838, %v918
    %v935 = vmul.f32 %v839, %v919
    %v936 = vmul.f32 %v840, %v920
    %v937 = vmul.f32 %v841, %v921
    %v938 = vmul.f32 %v842, %v922
    %v939 = vmul.f32 %v843, %v923
    %v940 = vmul.f32 %v844, %v924
    %v941 = vmul.f32 %v845, %v925
    %v942 = vadd.f32 %v926, %v927
    %v943 = vadd.f32 %v942, %v928
    %v944 = vadd.f32 %v943, %v929
    %v945 = vadd.f32 %v944, %v930
    %v946 = vadd.f32 %v945, %v931
    %v947 = vadd.f32 %v946, %v932
    %v948 = vadd.f32 %v947, %v933
    %v949 = vrot.slane %v948, 4
    %v950 = vadd.f32 %v948, %v949
    %v951 = vrot.slane %v950, 2
    %v952 = vadd.f32 %v950, %v951
    %v953 = vrot.slane %v952, 1
    %v954 = vadd.f32 %v952, %v953
    %v955 = vadd.f32 %v934, %v935
    %v956 = vadd.f32 %v955, %v936
    %v957 = vadd.f32 %v956, %v937
    %v958 = vadd.f32 %v957, %v938
    %v959 = vadd.f32 %v958, %v939
    %v960 = vadd.f32 %v959, %v940
    %v961 = vadd.f32 %v960, %v941
    %v962 = vrot.slane %v961, 4
    %v963 = vadd.f32 %v961, %v962
    %v964 = vrot.slane %v963, 2
    %v965 = vadd.f32 %v963, %v964
    %v966 = vrot.slane %v965, 1
    %v967 = vadd.f32 %v965, %v966
    %v968 = vrcp.pop 64.0
    %v969 = vmul.f32 64.0, %v968
    %v970 = vsub.f32 1.0, %v969
    %v971 = vmul.f32 %v968, %v970
    %v972 = vadd.f32 %v968, %v971
    %vm973 = vweird.f32 %v968
    %v974 = vsel %vm973, %v968, %v972
    %v975 = vmul.f32 %v954, %v974
    %v976 = vmul.f32 %v967, %v974
    %v977 = vpack.c.bf16 %v975, %v975
    %v978 = vpack.c.bf16 %v976, %v976
    %s979 = scalar_lea.vmem %s1, 64
    %v980 = vld [vmem:[%s979] sm:$0xf]
    %v981 = vld [vmem:[%s979 + $0x4] sm:$0xf]
    %v982 = vld [vmem:[%s979 + $0x8] sm:$0xf]
    %v983 = vld [vmem:[%s979 + $0xc] sm:$0xf]
    %v984 = vld [vmem:[%s979 + $0x10] sm:$0xf]
    %v985 = vld [vmem:[%s979 + $0x14] sm:$0xf]
    %v986 = vld [vmem:[%s979 + $0x18] sm:$0xf]
    %v987 = vld [vmem:[%s979 + $0x1c] sm:$0xf]
    %v988 = vld [vmem:[%s979 + $0x20] sm:$0xf]
    %v989 = vld [vmem:[%s979 + $0x24] sm:$0xf]
    %v990 = vld [vmem:[%s979 + $0x28] sm:$0xf]
    %v991 = vld [vmem:[%s979 + $0x2c] sm:$0xf]
    %v992 = vld [vmem:[%s979 + $0x30] sm:$0xf]
    %v993 = vld [vmem:[%s979 + $0x34] sm:$0xf]
    %v994 = vld [vmem:[%s979 + $0x38] sm:$0xf]
    %v995 = vld [vmem:[%s979 + $0x3c] sm:$0xf]
    %v996 = vld [vmem:[%s3 + $0x2] sm:$0x1]
    %v997 = vperm.slane %v996, 0
    %v1000 = vunpack.c.l.b16 %v977
    %v1001 = vunpack.c.l.b16 %v978
    %vm1002 = vcmask 1041409
    %v1003 = vsel %vm1002, %v1001, %v1000
    %v1004 = vpack.c.b16 %v1003, %v1003
    %v1022 = vunpack.c.l.b16 %v980
    %v1023 = vunpack.c.l.b16 %v981
    %v1024 = vunpack.c.l.b16 %v982
    %v1025 = vunpack.c.l.b16 %v983
    %v1026 = vunpack.c.l.b16 %v984
    %v1027 = vunpack.c.l.b16 %v985
    %v1028 = vunpack.c.l.b16 %v986
    %v1029 = vunpack.c.l.b16 %v987
    %v1030 = vunpack.c.l.b16 %v988
    %v1031 = vunpack.c.l.b16 %v989
    %v1032 = vunpack.c.l.b16 %v990
    %v1033 = vunpack.c.l.b16 %v991
    %v1034 = vunpack.c.l.b16 %v992
    %v1035 = vunpack.c.l.b16 %v993
    %v1036 = vunpack.c.l.b16 %v994
    %v1037 = vunpack.c.l.b16 %v995
    %v1038 = vpack.c.b16 %v1023, %v1022
    %v1039 = vpack.c.b16 %v1025, %v1024
    %v1040 = vpack.c.b16 %v1027, %v1026
    %v1041 = vpack.c.b16 %v1029, %v1028
    %v1042 = vpack.c.b16 %v1031, %v1030
    %v1043 = vpack.c.b16 %v1033, %v1032
    %v1044 = vpack.c.b16 %v1035, %v1034
    %v1045 = vpack.c.b16 %v1037, %v1036
    %1054 = vmatpush.bf16.msra.mxu0 %v1045
    %1055 = vmatpush.bf16.msra.mxu0 %v1044
    %1056 = vmatpush.bf16.msra.mxu0 %v1043
    %1057 = vmatpush.bf16.msra.mxu0 %v1042
    %1058 = vmatpush.bf16.msra.mxu0 %v1041
    %1059 = vmatpush.bf16.msra.mxu0 %v1040
    %1060 = vmatpush.bf16.msra.mxu0 %v1039
    %1061 = vmatpush.bf16.msra.mxu0 %v1038
    %1062 = vmatmul.bf16.gmra.mxu0 %v1004
    %v1063 = vpop.f32.mrf.mxu0
    %v1064 = vadd.f32 %v997, %v1063
    %v1065 = vpop.f32.mrf.mxu0
    %1066 = vdwg.mxu0
    %v1067 = vsub.f32 0.0, %v1064
    %v1068 = vmul.f32 %v1067, 1.442695
    %v1069 = vpow.pop %v1068
    %v1070 = vadd.f32 %v1069, 1.0
    %v1071 = vrcp.pop %v1070
    %v1072 = vmul.f32 %v1064, %v1071
    %v1073 = vpack.c.bf16 %v1072, %v1072
    %s1074 = scalar_lea.vmem %s1, 128
    %v1075 = vld [vmem:[%s1074] sm:$0xf]
    %v1076 = vld [vmem:[%s1074 + $0x4] sm:$0xf]
    %v1077 = vld [vmem:[%s1074 + $0x8] sm:$0xf]
    %v1078 = vld [vmem:[%s1074 + $0xc] sm:$0xf]
    %v1079 = vld [vmem:[%s1074 + $0x10] sm:$0xf]
    %v1080 = vld [vmem:[%s1074 + $0x14] sm:$0xf]
    %v1081 = vld [vmem:[%s1074 + $0x18] sm:$0xf]
    %v1082 = vld [vmem:[%s1074 + $0x1c] sm:$0xf]
    %v1083 = vld [vmem:[%s1074 + $0x20] sm:$0xf]
    %v1084 = vld [vmem:[%s1074 + $0x24] sm:$0xf]
    %v1085 = vld [vmem:[%s1074 + $0x28] sm:$0xf]
    %v1086 = vld [vmem:[%s1074 + $0x2c] sm:$0xf]
    %v1087 = vld [vmem:[%s1074 + $0x30] sm:$0xf]
    %v1088 = vld [vmem:[%s1074 + $0x34] sm:$0xf]
    %v1089 = vld [vmem:[%s1074 + $0x38] sm:$0xf]
    %v1090 = vld [vmem:[%s1074 + $0x3c] sm:$0xf]
    %v1091 = vld [vmem:[%s3 + $0x3] sm:$0x1]
    %v1092 = vperm.slane %v1091, 0
    %v1109 = vunpack.c.l.b16 %v1075
    %v1110 = vunpack.c.l.b16 %v1076
    %v1111 = vunpack.c.l.b16 %v1077
    %v1112 = vunpack.c.l.b16 %v1078
    %v1113 = vunpack.c.l.b16 %v1079
    %v1114 = vunpack.c.l.b16 %v1080
    %v1115 = vunpack.c.l.b16 %v1081
    %v1116 = vunpack.c.l.b16 %v1082
    %v1117 = vunpack.c.l.b16 %v1083
    %v1118 = vunpack.c.l.b16 %v1084
    %v1119 = vunpack.c.l.b16 %v1085
    %v1120 = vunpack.c.l.b16 %v1086
    %v1121 = vunpack.c.l.b16 %v1087
    %v1122 = vunpack.c.l.b16 %v1088
    %v1123 = vunpack.c.l.b16 %v1089
    %v1124 = vunpack.c.l.b16 %v1090
    %v1125 = vpack.c.b16 %v1110, %v1109
    %v1126 = vpack.c.b16 %v1112, %v1111
    %v1127 = vpack.c.b16 %v1114, %v1113
    %v1128 = vpack.c.b16 %v1116, %v1115
    %v1129 = vpack.c.b16 %v1118, %v1117
    %v1130 = vpack.c.b16 %v1120, %v1119
    %v1131 = vpack.c.b16 %v1122, %v1121
    %v1132 = vpack.c.b16 %v1124, %v1123
    %1141 = vmatpush.bf16.msra.mxu0 %v1132
    %1142 = vmatpush.bf16.msra.mxu0 %v1131
    %1143 = vmatpush.bf16.msra.mxu0 %v1130
    %1144 = vmatpush.bf16.msra.mxu0 %v1129
    %1145 = vmatpush.bf16.msra.mxu0 %v1128
    %1146 = vmatpush.bf16.msra.mxu0 %v1127
    %1147 = vmatpush.bf16.msra.mxu0 %v1126
    %1148 = vmatpush.bf16.msra.mxu0 %v1125
    %1149 = vmatmul.bf16.gmra.mxu0 %v1073
    %v1150 = vpop.f32.mrf.mxu0
    %v1151 = vadd.f32 %v1092, %v1150
    %v1152 = vpop.f32.mrf.mxu0
    %1153 = vdwg.mxu0
    %v1154 = vsub.f32 0.0, %v1151
    %v1155 = vmul.f32 %v1154, 1.442695
    %v1156 = vpow.pop %v1155
    %v1157 = vadd.f32 %v1156, 1.0
    %v1158 = vrcp.pop %v1157
    %v1160 = vrot.slane %v1158, 1
    %v1161 = vperm.slane %v1158, 0
    %v1162 = vperm.slane %v1160, 0
    %v1165 = vmul.f32 %v926, %v1161
    %v1166 = vmul.f32 %v927, %v1161
    %v1167 = vmul.f32 %v928, %v1161
    %v1168 = vmul.f32 %v929, %v1161
    %v1169 = vmul.f32 %v930, %v1161
    %v1170 = vmul.f32 %v931, %v1161
    %v1171 = vmul.f32 %v932, %v1161
    %v1172 = vmul.f32 %v933, %v1161
    %v1173 = vmul.f32 %v934, %v1162
    %v1174 = vmul.f32 %v935, %v1162
    %v1175 = vmul.f32 %v936, %v1162
    %v1176 = vmul.f32 %v937, %v1162
    %v1177 = vmul.f32 %v938, %v1162
    %v1178 = vmul.f32 %v939, %v1162
    %v1179 = vmul.f32 %v940, %v1162
    %v1180 = vmul.f32 %v941, %v1162
    %v1181 = vpack.c.bf16 %v1166, %v1165
    %v1182 = vpack.c.bf16 %v1168, %v1167
    %v1183 = vpack.c.bf16 %v1170, %v1169
    %v1184 = vpack.c.bf16 %v1172, %v1171
    %v1185 = vpack.c.bf16 %v1174, %v1173
    %v1186 = vpack.c.bf16 %v1176, %v1175
    %v1187 = vpack.c.bf16 %v1178, %v1177
    %v1188 = vpack.c.bf16 %v1180, %v1179
    %s1189 = scalar_lea.vmem %s1, 192
    %v1190 = vld [vmem:[%s1189] sm:$0xf]
    %v1191 = vld [vmem:[%s1189 + $0x4] sm:$0xf]
    %v1192 = vld [vmem:[%s1189 + $0x8] sm:$0xf]
    %v1193 = vld [vmem:[%s1189 + $0xc] sm:$0xf]
    %v1194 = vld [vmem:[%s1189 + $0x10] sm:$0xf]
    %v1195 = vld [vmem:[%s1189 + $0x14] sm:$0xf]
    %v1196 = vld [vmem:[%s1189 + $0x18] sm:$0xf]
    %v1197 = vld [vmem:[%s1189 + $0x1c] sm:$0xf]
    %v1198 = vld [vmem:[%s1189 + $0x20] sm:$0xf]
    %v1199 = vld [vmem:[%s1189 + $0x24] sm:$0xf]
    %v1200 = vld [vmem:[%s1189 + $0x28] sm:$0xf]
    %v1201 = vld [vmem:[%s1189 + $0x2c] sm:$0xf]
    %v1202 = vld [vmem:[%s1189 + $0x30] sm:$0xf]
    %v1203 = vld [vmem:[%s1189 + $0x34] sm:$0xf]
    %v1204 = vld [vmem:[%s1189 + $0x38] sm:$0xf]
    %v1205 = vld [vmem:[%s1189 + $0x3c] sm:$0xf]
    %v1206 = vld [vmem:[%s3 + $0x4] sm:$0x1]
    %v1207 = vperm.slane %v1206, 0
    %v1224 = vunpack.c.l.b16 %v1190
    %v1225 = vunpack.c.l.b16 %v1191
    %v1226 = vunpack.c.l.b16 %v1192
    %v1227 = vunpack.c.l.b16 %v1193
    %v1228 = vunpack.c.l.b16 %v1194
    %v1229 = vunpack.c.l.b16 %v1195
    %v1230 = vunpack.c.l.b16 %v1196
    %v1231 = vunpack.c.l.b16 %v1197
    %v1232 = vunpack.c.l.b16 %v1198
    %v1233 = vunpack.c.l.b16 %v1199
    %v1234 = vunpack.c.l.b16 %v1200
    %v1235 = vunpack.c.l.b16 %v1201
    %v1236 = vunpack.c.l.b16 %v1202
    %v1237 = vunpack.c.l.b16 %v1203
    %v1238 = vunpack.c.l.b16 %v1204
    %v1239 = vunpack.c.l.b16 %v1205
    %v1240 = vpack.c.b16 %v1225, %v1224
    %v1241 = vpack.c.b16 %v1227, %v1226
    %v1242 = vpack.c.b16 %v1229, %v1228
    %v1243 = vpack.c.b16 %v1231, %v1230
    %v1244 = vpack.c.b16 %v1233, %v1232
    %v1245 = vpack.c.b16 %v1235, %v1234
    %v1246 = vpack.c.b16 %v1237, %v1236
    %v1247 = vpack.c.b16 %v1239, %v1238
    %1256 = vmatpush.bf16.msra.mxu0 %v1247
    %1257 = vmatpush.bf16.msra.mxu0 %v1246
    %1258 = vmatpush.bf16.msra.mxu0 %v1245
    %1259 = vmatpush.bf16.msra.mxu0 %v1244
    %1260 = vmatpush.bf16.msra.mxu0 %v1243
    %1261 = vmatpush.bf16.msra.mxu0 %v1242
    %1262 = vmatpush.bf16.msra.mxu0 %v1241
    %1263 = vmatpush.bf16.msra.mxu0 %v1240
    %1264 = vmatmul.bf16.gmra.mxu0 %v1181
    %v1265 = vpop.f32.mrf.mxu0
    %v1266 = vadd.f32 %v1207, %v1265
    %v1267 = vpop.f32.mrf.mxu0
    %v1268 = vadd.f32 %v1207, %v1267
    %1269 = vmatmul.bf16.gmra.mxu0 %v1182
    %v1270 = vpop.f32.mrf.mxu0
    %v1271 = vadd.f32 %v1207, %v1270
    %v1272 = vpop.f32.mrf.mxu0
    %v1273 = vadd.f32 %v1207, %v1272
    %1274 = vmatmul.bf16.gmra.mxu0 %v1183
    %v1275 = vpop.f32.mrf.mxu0
    %v1276 = vadd.f32 %v1207, %v1275
    %v1277 = vpop.f32.mrf.mxu0
    %v1278 = vadd.f32 %v1207, %v1277
    %1279 = vmatmul.bf16.gmra.mxu0 %v1184
    %v1280 = vpop.f32.mrf.mxu0
    %v1281 = vadd.f32 %v1207, %v1280
    %v1282 = vpop.f32.mrf.mxu0
    %v1283 = vadd.f32 %v1207, %v1282
    %1284 = vmatmul.bf16.gmra.mxu0 %v1185
    %v1285 = vpop.f32.mrf.mxu0
    %v1286 = vadd.f32 %v1207, %v1285
    %v1287 = vpop.f32.mrf.mxu0
    %v1288 = vadd.f32 %v1207, %v1287
    %1289 = vmatmul.bf16.gmra.mxu0 %v1186
    %v1290 = vpop.f32.mrf.mxu0
    %v1291 = vadd.f32 %v1207, %v1290
    %v1292 = vpop.f32.mrf.mxu0
    %v1293 = vadd.f32 %v1207, %v1292
    %1294 = vmatmul.bf16.gmra.mxu0 %v1187
    %v1295 = vpop.f32.mrf.mxu0
    %v1296 = vadd.f32 %v1207, %v1295
    %v1297 = vpop.f32.mrf.mxu0
    %v1298 = vadd.f32 %v1207, %v1297
    %1299 = vmatmul.bf16.gmra.mxu0 %v1188
    %v1300 = vpop.f32.mrf.mxu0
    %v1301 = vadd.f32 %v1207, %v1300
    %v1302 = vpop.f32.mrf.mxu0
    %v1303 = vadd.f32 %v1207, %v1302
    %1304 = vdwg.mxu0
    %v1305 = vadd.f32 %v1266, %v277
    %v1306 = vadd.f32 %v1268, %v278
    %v1307 = vadd.f32 %v1271, %v279
    %v1308 = vadd.f32 %v1273, %v280
    %v1309 = vadd.f32 %v1276, %v281
    %v1310 = vadd.f32 %v1278, %v282
    %v1311 = vadd.f32 %v1281, %v283
    %v1312 = vadd.f32 %v1283, %v284
    %v1313 = vadd.f32 %v1286, %v285
    %v1314 = vadd.f32 %v1288, %v286
    %v1315 = vadd.f32 %v1291, %v287
    %v1316 = vadd.f32 %v1293, %v288
    %v1317 = vadd.f32 %v1296, %v289
    %v1318 = vadd.f32 %v1298, %v290
    %v1319 = vadd.f32 %v1301, %v291
    %v1320 = vadd.f32 %v1303, %v292
    %v1321 = vpack.c.bf16 %v1306, %v1305
    %v1322 = vpack.c.bf16 %v1308, %v1307
    %v1323 = vpack.c.bf16 %v1310, %v1309
    %v1324 = vpack.c.bf16 %v1312, %v1311
    %v1325 = vpack.c.bf16 %v1314, %v1313
    %v1326 = vpack.c.bf16 %v1316, %v1315
    %v1327 = vpack.c.bf16 %v1318, %v1317
    %v1328 = vpack.c.bf16 %v1320, %v1319
    %s1329 = scalar_lea.vmem %s1, 256
    %v1330 = vld [vmem:[%s1329] sm:$0xf]
    %v1331 = vld [vmem:[%s1329 + $0x4] sm:$0xf]
    %v1332 = vld [vmem:[%s1329 + $0x8] sm:$0xf]
    %v1333 = vld [vmem:[%s1329 + $0xc] sm:$0xf]
    %v1334 = vld [vmem:[%s1329 + $0x10] sm:$0xf]
    %v1335 = vld [vmem:[%s1329 + $0x14] sm:$0xf]
    %v1336 = vld [vmem:[%s1329 + $0x18] sm:$0xf]
    %v1337 = vld [vmem:[%s1329 + $0x1c] sm:$0xf]
    %v1338 = vld [vmem:[%s1329 + $0x20] sm:$0xf]
    %v1339 = vld [vmem:[%s1329 + $0x24] sm:$0xf]
    %v1340 = vld [vmem:[%s1329 + $0x28] sm:$0xf]
    %v1341 = vld [vmem:[%s1329 + $0x2c] sm:$0xf]
    %v1342 = vld [vmem:[%s1329 + $0x30] sm:$0xf]
    %v1343 = vld [vmem:[%s1329 + $0x34] sm:$0xf]
    %v1344 = vld [vmem:[%s1329 + $0x38] sm:$0xf]
    %v1345 = vld [vmem:[%s1329 + $0x3c] sm:$0xf]
    %v1346 = vld [vmem:[%s3 + $0x5] sm:$0x1]
    %v1347 = vperm.slane %v1346, 0
    %v1364 = vunpack.c.l.b16 %v1330
    %v1365 = vunpack.c.l.b16 %v1331
    %v1366 = vunpack.c.l.b16 %v1332
    %v1367 = vunpack.c.l.b16 %v1333
    %v1368 = vunpack.c.l.b16 %v1334
    %v1369 = vunpack.c.l.b16 %v1335
    %v1370 = vunpack.c.l.b16 %v1336
    %v1371 = vunpack.c.l.b16 %v1337
    %v1372 = vunpack.c.l.b16 %v1338
    %v1373 = vunpack.c.l.b16 %v1339
    %v1374 = vunpack.c.l.b16 %v1340
    %v1375 = vunpack.c.l.b16 %v1341
    %v1376 = vunpack.c.l.b16 %v1342
    %v1377 = vunpack.c.l.b16 %v1343
    %v1378 = vunpack.c.l.b16 %v1344
    %v1379 = vunpack.c.l.b16 %v1345
    %v1380 = vpack.c.b16 %v1365, %v1364
    %v1381 = vpack.c.b16 %v1367, %v1366
    %v1382 = vpack.c.b16 %v1369, %v1368
    %v1383 = vpack.c.b16 %v1371, %v1370
    %v1384 = vpack.c.b16 %v1373, %v1372
    %v1385 = vpack.c.b16 %v1375, %v1374
    %v1386 = vpack.c.b16 %v1377, %v1376
    %v1387 = vpack.c.b16 %v1379, %v1378
    %1396 = vmatpush.bf16.msra.mxu0 %v1387
    %1397 = vmatpush.bf16.msra.mxu0 %v1386
    %1398 = vmatpush.bf16.msra.mxu0 %v1385
    %1399 = vmatpush.bf16.msra.mxu0 %v1384
    %1400 = vmatpush.bf16.msra.mxu0 %v1383
    %1401 = vmatpush.bf16.msra.mxu0 %v1382
    %1402 = vmatpush.bf16.msra.mxu0 %v1381
    %1403 = vmatpush.bf16.msra.mxu0 %v1380
    %1404 = vmatmul.bf16.gmra.mxu0 %v1321
    %v1405 = vpop.f32.mrf.mxu0
    %v1406 = vadd.f32 %v1347, %v1405
    %v1407 = vpop.f32.mrf.mxu0
    %v1408 = vadd.f32 %v1347, %v1407
    %1409 = vmatmul.bf16.gmra.mxu0 %v1322
    %v1410 = vpop.f32.mrf.mxu0
    %v1411 = vadd.f32 %v1347, %v1410
    %v1412 = vpop.f32.mrf.mxu0
    %v1413 = vadd.f32 %v1347, %v1412
    %1414 = vmatmul.bf16.gmra.mxu0 %v1323
    %v1415 = vpop.f32.mrf.mxu0
    %v1416 = vadd.f32 %v1347, %v1415
    %v1417 = vpop.f32.mrf.mxu0
    %v1418 = vadd.f32 %v1347, %v1417
    %1419 = vmatmul.bf16.gmra.mxu0 %v1324
    %v1420 = vpop.f32.mrf.mxu0
    %v1421 = vadd.f32 %v1347, %v1420
    %v1422 = vpop.f32.mrf.mxu0
    %v1423 = vadd.f32 %v1347, %v1422
    %1424 = vmatmul.bf16.gmra.mxu0 %v1325
    %v1425 = vpop.f32.mrf.mxu0
    %v1426 = vadd.f32 %v1347, %v1425
    %v1427 = vpop.f32.mrf.mxu0
    %v1428 = vadd.f32 %v1347, %v1427
    %1429 = vmatmul.bf16.gmra.mxu0 %v1326
    %v1430 = vpop.f32.mrf.mxu0
    %v1431 = vadd.f32 %v1347, %v1430
    %v1432 = vpop.f32.mrf.mxu0
    %v1433 = vadd.f32 %v1347, %v1432
    %1434 = vmatmul.bf16.gmra.mxu0 %v1327
    %v1435 = vpop.f32.mrf.mxu0
    %v1436 = vadd.f32 %v1347, %v1435
    %v1437 = vpop.f32.mrf.mxu0
    %v1438 = vadd.f32 %v1347, %v1437
    %1439 = vmatmul.bf16.gmra.mxu0 %v1328
    %v1440 = vpop.f32.mrf.mxu0
    %v1441 = vadd.f32 %v1347, %v1440
    %v1442 = vpop.f32.mrf.mxu0
    %v1443 = vadd.f32 %v1347, %v1442
    %1444 = vdwg.mxu0
    %v1445 = vsub.f32 0.0, %v1406
    %v1446 = vsub.f32 0.0, %v1408
    %v1447 = vsub.f32 0.0, %v1411
    %v1448 = vsub.f32 0.0, %v1413
    %v1449 = vsub.f32 0.0, %v1416
    %v1450 = vsub.f32 0.0, %v1418
    %v1451 = vsub.f32 0.0, %v1421
    %v1452 = vsub.f32 0.0, %v1423
    %v1453 = vsub.f32 0.0, %v1426
    %v1454 = vsub.f32 0.0, %v1428
    %v1455 = vsub.f32 0.0, %v1431
    %v1456 = vsub.f32 0.0, %v1433
    %v1457 = vsub.f32 0.0, %v1436
    %v1458 = vsub.f32 0.0, %v1438
    %v1459 = vsub.f32 0.0, %v1441
    %v1460 = vsub.f32 0.0, %v1443
    %v1461 = vmul.f32 %v1445, 1.442695
    %v1462 = vpow.pop %v1461
    %v1463 = vmul.f32 %v1446, 1.442695
    %v1464 = vpow.pop %v1463
    %v1465 = vmul.f32 %v1447, 1.442695
    %v1466 = vpow.pop %v1465
    %v1467 = vmul.f32 %v1448, 1.442695
    %v1468 = vpow.pop %v1467
    %v1469 = vmul.f32 %v1449, 1.442695
    %v1470 = vpow.pop %v1469
    %v1471 = vmul.f32 %v1450, 1.442695
    %v1472 = vpow.pop %v1471
    %v1473 = vmul.f32 %v1451, 1.442695
    %v1474 = vpow.pop %v1473
    %v1475 = vmul.f32 %v1452, 1.442695
    %v1476 = vpow.pop %v1475
    %v1477 = vmul.f32 %v1453, 1.442695
    %v1478 = vpow.pop %v1477
    %v1479 = vmul.f32 %v1454, 1.442695
    %v1480 = vpow.pop %v1479
    %v1481 = vmul.f32 %v1455, 1.442695
    %v1482 = vpow.pop %v1481
    %v1483 = vmul.f32 %v1456, 1.442695
    %v1484 = vpow.pop %v1483
    %v1485 = vmul.f32 %v1457, 1.442695
    %v1486 = vpow.pop %v1485
    %v1487 = vmul.f32 %v1458, 1.442695
    %v1488 = vpow.pop %v1487
    %v1489 = vmul.f32 %v1459, 1.442695
    %v1490 = vpow.pop %v1489
    %v1491 = vmul.f32 %v1460, 1.442695
    %v1492 = vpow.pop %v1491
    %v1493 = vadd.f32 %v1462, 1.0
    %v1494 = vadd.f32 %v1464, 1.0
    %v1495 = vadd.f32 %v1466, 1.0
    %v1496 = vadd.f32 %v1468, 1.0
    %v1497 = vadd.f32 %v1470, 1.0
    %v1498 = vadd.f32 %v1472, 1.0
    %v1499 = vadd.f32 %v1474, 1.0
    %v1500 = vadd.f32 %v1476, 1.0
    %v1501 = vadd.f32 %v1478, 1.0
    %v1502 = vadd.f32 %v1480, 1.0
    %v1503 = vadd.f32 %v1482, 1.0
    %v1504 = vadd.f32 %v1484, 1.0
    %v1505 = vadd.f32 %v1486, 1.0
    %v1506 = vadd.f32 %v1488, 1.0
    %v1507 = vadd.f32 %v1490, 1.0
    %v1508 = vadd.f32 %v1492, 1.0
    %v1509 = vrcp.pop %v1493
    %v1510 = vrcp.pop %v1494
    %v1511 = vrcp.pop %v1495
    %v1512 = vrcp.pop %v1496
    %v1513 = vrcp.pop %v1497
    %v1514 = vrcp.pop %v1498
    %v1515 = vrcp.pop %v1499
    %v1516 = vrcp.pop %v1500
    %v1517 = vrcp.pop %v1501
    %v1518 = vrcp.pop %v1502
    %v1519 = vrcp.pop %v1503
    %v1520 = vrcp.pop %v1504
    %v1521 = vrcp.pop %v1505
    %v1522 = vrcp.pop %v1506
    %v1523 = vrcp.pop %v1507
    %v1524 = vrcp.pop %v1508
    %v1525 = vmul.f32 %v1406, %v1509
    %v1526 = vmul.f32 %v1408, %v1510
    %v1527 = vmul.f32 %v1411, %v1511
    %v1528 = vmul.f32 %v1413, %v1512
    %v1529 = vmul.f32 %v1416, %v1513
    %v1530 = vmul.f32 %v1418, %v1514
    %v1531 = vmul.f32 %v1421, %v1515
    %v1532 = vmul.f32 %v1423, %v1516
    %v1533 = vmul.f32 %v1426, %v1517
    %v1534 = vmul.f32 %v1428, %v1518
    %v1535 = vmul.f32 %v1431, %v1519
    %v1536 = vmul.f32 %v1433, %v1520
    %v1537 = vmul.f32 %v1436, %v1521
    %v1538 = vmul.f32 %v1438, %v1522
    %v1539 = vmul.f32 %v1441, %v1523
    %v1540 = vmul.f32 %v1443, %v1524
    %s1541 = scalar_lea.vmem %s2, 16
    %v1542 = vld [vmem:[%s1541] sm:$0xff]
    %v1543 = vld [vmem:[%s1541 + $0x8] sm:$0x1]
    %v1560 = vrot.slane %v1525, 7
    %v1561 = vrot.slane %v1526, 7
    %v1562 = vrot.slane %v1527, 7
    %v1563 = vrot.slane %v1528, 7
    %v1564 = vrot.slane %v1529, 7
    %v1565 = vrot.slane %v1530, 7
    %v1566 = vrot.slane %v1531, 7
    %v1567 = vrot.slane %v1532, 7
    %v1568 = vrot.slane %v1533, 7
    %v1569 = vrot.slane %v1534, 7
    %v1570 = vrot.slane %v1535, 7
    %v1571 = vrot.slane %v1536, 7
    %v1572 = vrot.slane %v1537, 7
    %v1573 = vrot.slane %v1538, 7
    %v1574 = vrot.slane %v1539, 7
    %v1575 = vrot.slane %v1540, 7
    %v1592 = vsel %vm343, 0.0, %v1560
    %v1593 = vsel %vm343, 0.0, %v1561
    %v1594 = vsel %vm343, 0.0, %v1562
    %v1595 = vsel %vm343, 0.0, %v1563
    %v1596 = vsel %vm343, 0.0, %v1564
    %v1597 = vsel %vm343, 0.0, %v1565
    %v1598 = vsel %vm343, 0.0, %v1566
    %v1599 = vsel %vm343, 0.0, %v1567
    %v1600 = vsel %vm343, 0.0, %v1568
    %v1601 = vsel %vm343, 0.0, %v1569
    %v1602 = vsel %vm343, 0.0, %v1570
    %v1603 = vsel %vm343, 0.0, %v1571
    %v1604 = vsel %vm343, 0.0, %v1572
    %v1605 = vsel %vm343, 0.0, %v1573
    %v1606 = vsel %vm343, 0.0, %v1574
    %v1607 = vsel %vm343, 0.0, %v1575
    %v1608 = vsel %vm343, %v1560, 0.0
    %v1609 = vsel %vm343, %v1561, 0.0
    %v1610 = vsel %vm343, %v1562, 0.0
    %v1611 = vsel %vm343, %v1563, 0.0
    %v1612 = vsel %vm343, %v1564, 0.0
    %v1613 = vsel %vm343, %v1565, 0.0
    %v1614 = vsel %vm343, %v1566, 0.0
    %v1615 = vsel %vm343, %v1567, 0.0
    %v1616 = vsel %vm343, %v1568, 0.0
    %v1617 = vsel %vm343, %v1569, 0.0
    %v1618 = vsel %vm343, %v1570, 0.0
    %v1619 = vsel %vm343, %v1571, 0.0
    %v1620 = vsel %vm343, %v1572, 0.0
    %v1621 = vsel %vm343, %v1573, 0.0
    %v1622 = vsel %vm343, %v1574, 0.0
    %v1623 = vsel %vm343, %v1575, 0.0
    %v1624 = vperm.slane %v1542, 0
    %v1625 = vmul.f32 %v1624, 0.0
    %v1626 = vmul.f32 %v1592, %v1624
    %v1627 = vmul.f32 %v1593, %v1624
    %v1628 = vmul.f32 %v1594, %v1624
    %v1629 = vmul.f32 %v1595, %v1624
    %v1630 = vmul.f32 %v1596, %v1624
    %v1631 = vmul.f32 %v1597, %v1624
    %v1632 = vmul.f32 %v1598, %v1624
    %v1633 = vmul.f32 %v1600, %v1624
    %v1634 = vmul.f32 %v1601, %v1624
    %v1635 = vmul.f32 %v1602, %v1624
    %v1636 = vmul.f32 %v1603, %v1624
    %v1637 = vmul.f32 %v1604, %v1624
    %v1638 = vmul.f32 %v1605, %v1624
    %v1639 = vmul.f32 %v1606, %v1624
    %v1640 = vadd.f32 %v1625, 0.0
    %v1641 = vadd.f32 %v1626, 0.0
    %v1642 = vadd.f32 %v1627, 0.0
    %v1643 = vadd.f32 %v1628, 0.0
    %v1644 = vadd.f32 %v1629, 0.0
    %v1645 = vadd.f32 %v1630, 0.0
    %v1646 = vadd.f32 %v1631, 0.0
    %v1647 = vadd.f32 %v1632, 0.0
    %v1648 = vadd.f32 %v1633, 0.0
    %v1649 = vadd.f32 %v1634, 0.0
    %v1650 = vadd.f32 %v1635, 0.0
    %v1651 = vadd.f32 %v1636, 0.0
    %v1652 = vadd.f32 %v1637, 0.0
    %v1653 = vadd.f32 %v1638, 0.0
    %v1654 = vadd.f32 %v1639, 0.0
    %v1655 = vperm.slane %v1542, 3
    %v1656 = vmul.f32 %v1592, %v1655
    %v1657 = vmul.f32 %v1593, %v1655
    %v1658 = vmul.f32 %v1594, %v1655
    %v1659 = vmul.f32 %v1595, %v1655
    %v1660 = vmul.f32 %v1596, %v1655
    %v1661 = vmul.f32 %v1597, %v1655
    %v1662 = vmul.f32 %v1598, %v1655
    %v1663 = vmul.f32 %v1599, %v1655
    %v1664 = vmul.f32 %v1600, %v1655
    %v1665 = vmul.f32 %v1601, %v1655
    %v1666 = vmul.f32 %v1602, %v1655
    %v1667 = vmul.f32 %v1603, %v1655
    %v1668 = vmul.f32 %v1604, %v1655
    %v1669 = vmul.f32 %v1605, %v1655
    %v1670 = vmul.f32 %v1606, %v1655
    %v1671 = vmul.f32 %v1607, %v1655
    %v1672 = vadd.f32 %v1640, %v1656
    %v1673 = vadd.f32 %v1641, %v1657
    %v1674 = vadd.f32 %v1642, %v1658
    %v1675 = vadd.f32 %v1643, %v1659
    %v1676 = vadd.f32 %v1644, %v1660
    %v1677 = vadd.f32 %v1645, %v1661
    %v1678 = vadd.f32 %v1646, %v1662
    %v1679 = vadd.f32 %v1647, %v1663
    %v1680 = vadd.f32 %v1640, %v1664
    %v1681 = vadd.f32 %v1648, %v1665
    %v1682 = vadd.f32 %v1649, %v1666
    %v1683 = vadd.f32 %v1650, %v1667
    %v1684 = vadd.f32 %v1651, %v1668
    %v1685 = vadd.f32 %v1652, %v1669
    %v1686 = vadd.f32 %v1653, %v1670
    %v1687 = vadd.f32 %v1654, %v1671
    %v1688 = vperm.slane %v1542, 6
    %v1689 = vmul.f32 %v1593, %v1688
    %v1690 = vmul.f32 %v1594, %v1688
    %v1691 = vmul.f32 %v1595, %v1688
    %v1692 = vmul.f32 %v1596, %v1688
    %v1693 = vmul.f32 %v1597, %v1688
    %v1694 = vmul.f32 %v1598, %v1688
    %v1695 = vmul.f32 %v1599, %v1688
    %v1696 = vmul.f32 %v1688, 0.0
    %v1697 = vmul.f32 %v1601, %v1688
    %v1698 = vmul.f32 %v1602, %v1688
    %v1699 = vmul.f32 %v1603, %v1688
    %v1700 = vmul.f32 %v1604, %v1688
    %v1701 = vmul.f32 %v1605, %v1688
    %v1702 = vmul.f32 %v1606, %v1688
    %v1703 = vmul.f32 %v1607, %v1688
    %v1704 = vadd.f32 %v1672, %v1689
    %v1705 = vadd.f32 %v1673, %v1690
    %v1706 = vadd.f32 %v1674, %v1691
    %v1707 = vadd.f32 %v1675, %v1692
    %v1708 = vadd.f32 %v1676, %v1693
    %v1709 = vadd.f32 %v1677, %v1694
    %v1710 = vadd.f32 %v1678, %v1695
    %v1711 = vadd.f32 %v1679, %v1696
    %v1712 = vadd.f32 %v1680, %v1697
    %v1713 = vadd.f32 %v1681, %v1698
    %v1714 = vadd.f32 %v1682, %v1699
    %v1715 = vadd.f32 %v1683, %v1700
    %v1716 = vadd.f32 %v1684, %v1701
    %v1717 = vadd.f32 %v1685, %v1702
    %v1718 = vadd.f32 %v1686, %v1703
    %v1719 = vadd.f32 %v1687, %v1696
    %v1752 = vrot.slane %v1592, 1
    %v1753 = vrot.slane %v1608, 1
    %v1754 = vsel %vm504, %v1752, %v1753
    %v1755 = vrot.slane %v1593, 1
    %v1756 = vrot.slane %v1609, 1
    %v1757 = vsel %vm504, %v1755, %v1756
    %v1758 = vrot.slane %v1594, 1
    %v1759 = vrot.slane %v1610, 1
    %v1760 = vsel %vm504, %v1758, %v1759
    %v1761 = vrot.slane %v1595, 1
    %v1762 = vrot.slane %v1611, 1
    %v1763 = vsel %vm504, %v1761, %v1762
    %v1764 = vrot.slane %v1596, 1
    %v1765 = vrot.slane %v1612, 1
    %v1766 = vsel %vm504, %v1764, %v1765
    %v1767 = vrot.slane %v1597, 1
    %v1768 = vrot.slane %v1613, 1
    %v1769 = vsel %vm504, %v1767, %v1768
    %v1770 = vrot.slane %v1598, 1
    %v1771 = vrot.slane %v1614, 1
    %v1772 = vsel %vm504, %v1770, %v1771
    %v1773 = vrot.slane %v1599, 1
    %v1774 = vrot.slane %v1615, 1
    %v1775 = vsel %vm504, %v1773, %v1774
    %v1776 = vrot.slane %v1600, 1
    %v1777 = vrot.slane %v1616, 1
    %v1778 = vsel %vm504, %v1776, %v1777
    %v1779 = vrot.slane %v1601, 1
    %v1780 = vrot.slane %v1617, 1
    %v1781 = vsel %vm504, %v1779, %v1780
    %v1782 = vrot.slane %v1602, 1
    %v1783 = vrot.slane %v1618, 1
    %v1784 = vsel %vm504, %v1782, %v1783
    %v1785 = vrot.slane %v1603, 1
    %v1786 = vrot.slane %v1619, 1
    %v1787 = vsel %vm504, %v1785, %v1786
    %v1788 = vrot.slane %v1604, 1
    %v1789 = vrot.slane %v1620, 1
    %v1790 = vsel %vm504, %v1788, %v1789
    %v1791 = vrot.slane %v1605, 1
    %v1792 = vrot.slane %v1621, 1
    %v1793 = vsel %vm504, %v1791, %v1792
    %v1794 = vrot.slane %v1606, 1
    %v1795 = vrot.slane %v1622, 1
    %v1796 = vsel %vm504, %v1794, %v1795
    %v1797 = vrot.slane %v1607, 1
    %v1798 = vrot.slane %v1623, 1
    %v1799 = vsel %vm504, %v1797, %v1798
    %v1816 = vperm.slane %v1542, 1
    %v1817 = vmul.f32 %v1816, 0.0
    %v1818 = vmul.f32 %v1754, %v1816
    %v1819 = vmul.f32 %v1757, %v1816
    %v1820 = vmul.f32 %v1760, %v1816
    %v1821 = vmul.f32 %v1763, %v1816
    %v1822 = vmul.f32 %v1766, %v1816
    %v1823 = vmul.f32 %v1769, %v1816
    %v1824 = vmul.f32 %v1772, %v1816
    %v1825 = vmul.f32 %v1778, %v1816
    %v1826 = vmul.f32 %v1781, %v1816
    %v1827 = vmul.f32 %v1784, %v1816
    %v1828 = vmul.f32 %v1787, %v1816
    %v1829 = vmul.f32 %v1790, %v1816
    %v1830 = vmul.f32 %v1793, %v1816
    %v1831 = vmul.f32 %v1796, %v1816
    %v1832 = vadd.f32 %v1704, %v1817
    %v1833 = vadd.f32 %v1705, %v1818
    %v1834 = vadd.f32 %v1706, %v1819
    %v1835 = vadd.f32 %v1707, %v1820
    %v1836 = vadd.f32 %v1708, %v1821
    %v1837 = vadd.f32 %v1709, %v1822
    %v1838 = vadd.f32 %v1710, %v1823
    %v1839 = vadd.f32 %v1711, %v1824
    %v1840 = vadd.f32 %v1712, %v1817
    %v1841 = vadd.f32 %v1713, %v1825
    %v1842 = vadd.f32 %v1714, %v1826
    %v1843 = vadd.f32 %v1715, %v1827
    %v1844 = vadd.f32 %v1716, %v1828
    %v1845 = vadd.f32 %v1717, %v1829
    %v1846 = vadd.f32 %v1718, %v1830
    %v1847 = vadd.f32 %v1719, %v1831
    %v1848 = vperm.slane %v1542, 4
    %v1849 = vmul.f32 %v1754, %v1848
    %v1850 = vmul.f32 %v1757, %v1848
    %v1851 = vmul.f32 %v1760, %v1848
    %v1852 = vmul.f32 %v1763, %v1848
    %v1853 = vmul.f32 %v1766, %v1848
    %v1854 = vmul.f32 %v1769, %v1848
    %v1855 = vmul.f32 %v1772, %v1848
    %v1856 = vmul.f32 %v1775, %v1848
    %v1857 = vmul.f32 %v1778, %v1848
    %v1858 = vmul.f32 %v1781, %v1848
    %v1859 = vmul.f32 %v1784, %v1848
    %v1860 = vmul.f32 %v1787, %v1848
    %v1861 = vmul.f32 %v1790, %v1848
    %v1862 = vmul.f32 %v1793, %v1848
    %v1863 = vmul.f32 %v1796, %v1848
    %v1864 = vmul.f32 %v1799, %v1848
    %v1865 = vadd.f32 %v1832, %v1849
    %v1866 = vadd.f32 %v1833, %v1850
    %v1867 = vadd.f32 %v1834, %v1851
    %v1868 = vadd.f32 %v1835, %v1852
    %v1869 = vadd.f32 %v1836, %v1853
    %v1870 = vadd.f32 %v1837, %v1854
    %v1871 = vadd.f32 %v1838, %v1855
    %v1872 = vadd.f32 %v1839, %v1856
    %v1873 = vadd.f32 %v1840, %v1857
    %v1874 = vadd.f32 %v1841, %v1858
    %v1875 = vadd.f32 %v1842, %v1859
    %v1876 = vadd.f32 %v1843, %v1860
    %v1877 = vadd.f32 %v1844, %v1861
    %v1878 = vadd.f32 %v1845, %v1862
    %v1879 = vadd.f32 %v1846, %v1863
    %v1880 = vadd.f32 %v1847, %v1864
    %v1881 = vperm.slane %v1542, 7
    %v1882 = vmul.f32 %v1757, %v1881
    %v1883 = vmul.f32 %v1760, %v1881
    %v1884 = vmul.f32 %v1763, %v1881
    %v1885 = vmul.f32 %v1766, %v1881
    %v1886 = vmul.f32 %v1769, %v1881
    %v1887 = vmul.f32 %v1772, %v1881
    %v1888 = vmul.f32 %v1775, %v1881
    %v1889 = vmul.f32 %v1881, 0.0
    %v1890 = vmul.f32 %v1781, %v1881
    %v1891 = vmul.f32 %v1784, %v1881
    %v1892 = vmul.f32 %v1787, %v1881
    %v1893 = vmul.f32 %v1790, %v1881
    %v1894 = vmul.f32 %v1793, %v1881
    %v1895 = vmul.f32 %v1796, %v1881
    %v1896 = vmul.f32 %v1799, %v1881
    %v1897 = vadd.f32 %v1865, %v1882
    %v1898 = vadd.f32 %v1866, %v1883
    %v1899 = vadd.f32 %v1867, %v1884
    %v1900 = vadd.f32 %v1868, %v1885
    %v1901 = vadd.f32 %v1869, %v1886
    %v1902 = vadd.f32 %v1870, %v1887
    %v1903 = vadd.f32 %v1871, %v1888
    %v1904 = vadd.f32 %v1872, %v1889
    %v1905 = vadd.f32 %v1873, %v1890
    %v1906 = vadd.f32 %v1874, %v1891
    %v1907 = vadd.f32 %v1875, %v1892
    %v1908 = vadd.f32 %v1876, %v1893
    %v1909 = vadd.f32 %v1877, %v1894
    %v1910 = vadd.f32 %v1878, %v1895
    %v1911 = vadd.f32 %v1879, %v1896
    %v1912 = vadd.f32 %v1880, %v1889
    %v1913 = vrot.slane %v1592, 2
    %v1914 = vrot.slane %v1608, 2
    %v1915 = vsel %vm666, %v1913, %v1914
    %v1916 = vrot.slane %v1593, 2
    %v1917 = vrot.slane %v1609, 2
    %v1918 = vsel %vm666, %v1916, %v1917
    %v1919 = vrot.slane %v1594, 2
    %v1920 = vrot.slane %v1610, 2
    %v1921 = vsel %vm666, %v1919, %v1920
    %v1922 = vrot.slane %v1595, 2
    %v1923 = vrot.slane %v1611, 2
    %v1924 = vsel %vm666, %v1922, %v1923
    %v1925 = vrot.slane %v1596, 2
    %v1926 = vrot.slane %v1612, 2
    %v1927 = vsel %vm666, %v1925, %v1926
    %v1928 = vrot.slane %v1597, 2
    %v1929 = vrot.slane %v1613, 2
    %v1930 = vsel %vm666, %v1928, %v1929
    %v1931 = vrot.slane %v1598, 2
    %v1932 = vrot.slane %v1614, 2
    %v1933 = vsel %vm666, %v1931, %v1932
    %v1934 = vrot.slane %v1599, 2
    %v1935 = vrot.slane %v1615, 2
    %v1936 = vsel %vm666, %v1934, %v1935
    %v1937 = vrot.slane %v1600, 2
    %v1938 = vrot.slane %v1616, 2
    %v1939 = vsel %vm666, %v1937, %v1938
    %v1940 = vrot.slane %v1601, 2
    %v1941 = vrot.slane %v1617, 2
    %v1942 = vsel %vm666, %v1940, %v1941
    %v1943 = vrot.slane %v1602, 2
    %v1944 = vrot.slane %v1618, 2
    %v1945 = vsel %vm666, %v1943, %v1944
    %v1946 = vrot.slane %v1603, 2
    %v1947 = vrot.slane %v1619, 2
    %v1948 = vsel %vm666, %v1946, %v1947
    %v1949 = vrot.slane %v1604, 2
    %v1950 = vrot.slane %v1620, 2
    %v1951 = vsel %vm666, %v1949, %v1950
    %v1952 = vrot.slane %v1605, 2
    %v1953 = vrot.slane %v1621, 2
    %v1954 = vsel %vm666, %v1952, %v1953
    %v1955 = vrot.slane %v1606, 2
    %v1956 = vrot.slane %v1622, 2
    %v1957 = vsel %vm666, %v1955, %v1956
    %v1958 = vrot.slane %v1607, 2
    %v1959 = vrot.slane %v1623, 2
    %v1960 = vsel %vm666, %v1958, %v1959
    %v1977 = vperm.slane %v1542, 2
    %v1978 = vmul.f32 %v1977, 0.0
    %v1979 = vmul.f32 %v1915, %v1977
    %v1980 = vmul.f32 %v1918, %v1977
    %v1981 = vmul.f32 %v1921, %v1977
    %v1982 = vmul.f32 %v1924, %v1977
    %v1983 = vmul.f32 %v1927, %v1977
    %v1984 = vmul.f32 %v1930, %v1977
    %v1985 = vmul.f32 %v1933, %v1977
    %v1986 = vmul.f32 %v1939, %v1977
    %v1987 = vmul.f32 %v1942, %v1977
    %v1988 = vmul.f32 %v1945, %v1977
    %v1989 = vmul.f32 %v1948, %v1977
    %v1990 = vmul.f32 %v1951, %v1977
    %v1991 = vmul.f32 %v1954, %v1977
    %v1992 = vmul.f32 %v1957, %v1977
    %v1993 = vadd.f32 %v1897, %v1978
    %v1994 = vadd.f32 %v1898, %v1979
    %v1995 = vadd.f32 %v1899, %v1980
    %v1996 = vadd.f32 %v1900, %v1981
    %v1997 = vadd.f32 %v1901, %v1982
    %v1998 = vadd.f32 %v1902, %v1983
    %v1999 = vadd.f32 %v1903, %v1984
    %v2000 = vadd.f32 %v1904, %v1985
    %v2001 = vadd.f32 %v1905, %v1978
    %v2002 = vadd.f32 %v1906, %v1986
    %v2003 = vadd.f32 %v1907, %v1987
    %v2004 = vadd.f32 %v1908, %v1988
    %v2005 = vadd.f32 %v1909, %v1989
    %v2006 = vadd.f32 %v1910, %v1990
    %v2007 = vadd.f32 %v1911, %v1991
    %v2008 = vadd.f32 %v1912, %v1992
    %v2009 = vperm.slane %v1542, 5
    %v2010 = vmul.f32 %v1915, %v2009
    %v2011 = vmul.f32 %v1918, %v2009
    %v2012 = vmul.f32 %v1921, %v2009
    %v2013 = vmul.f32 %v1924, %v2009
    %v2014 = vmul.f32 %v1927, %v2009
    %v2015 = vmul.f32 %v1930, %v2009
    %v2016 = vmul.f32 %v1933, %v2009
    %v2017 = vmul.f32 %v1936, %v2009
    %v2018 = vmul.f32 %v1939, %v2009
    %v2019 = vmul.f32 %v1942, %v2009
    %v2020 = vmul.f32 %v1945, %v2009
    %v2021 = vmul.f32 %v1948, %v2009
    %v2022 = vmul.f32 %v1951, %v2009
    %v2023 = vmul.f32 %v1954, %v2009
    %v2024 = vmul.f32 %v1957, %v2009
    %v2025 = vmul.f32 %v1960, %v2009
    %v2026 = vadd.f32 %v1993, %v2010
    %v2027 = vadd.f32 %v1994, %v2011
    %v2028 = vadd.f32 %v1995, %v2012
    %v2029 = vadd.f32 %v1996, %v2013
    %v2030 = vadd.f32 %v1997, %v2014
    %v2031 = vadd.f32 %v1998, %v2015
    %v2032 = vadd.f32 %v1999, %v2016
    %v2033 = vadd.f32 %v2000, %v2017
    %v2034 = vadd.f32 %v2001, %v2018
    %v2035 = vadd.f32 %v2002, %v2019
    %v2036 = vadd.f32 %v2003, %v2020
    %v2037 = vadd.f32 %v2004, %v2021
    %v2038 = vadd.f32 %v2005, %v2022
    %v2039 = vadd.f32 %v2006, %v2023
    %v2040 = vadd.f32 %v2007, %v2024
    %v2041 = vadd.f32 %v2008, %v2025
    %v2042 = vperm.slane %v1543, 0
    %v2043 = vmul.f32 %v1918, %v2042
    %v2044 = vmul.f32 %v1921, %v2042
    %v2045 = vmul.f32 %v1924, %v2042
    %v2046 = vmul.f32 %v1927, %v2042
    %v2047 = vmul.f32 %v1930, %v2042
    %v2048 = vmul.f32 %v1933, %v2042
    %v2049 = vmul.f32 %v1936, %v2042
    %v2050 = vmul.f32 %v2042, 0.0
    %v2051 = vmul.f32 %v1942, %v2042
    %v2052 = vmul.f32 %v1945, %v2042
    %v2053 = vmul.f32 %v1948, %v2042
    %v2054 = vmul.f32 %v1951, %v2042
    %v2055 = vmul.f32 %v1954, %v2042
    %v2056 = vmul.f32 %v1957, %v2042
    %v2057 = vmul.f32 %v1960, %v2042
    %v2058 = vadd.f32 %v2026, %v2043
    %v2059 = vadd.f32 %v2027, %v2044
    %v2060 = vadd.f32 %v2028, %v2045
    %v2061 = vadd.f32 %v2029, %v2046
    %v2062 = vadd.f32 %v2030, %v2047
    %v2063 = vadd.f32 %v2031, %v2048
    %v2064 = vadd.f32 %v2032, %v2049
    %v2065 = vadd.f32 %v2033, %v2050
    %v2066 = vadd.f32 %v2034, %v2051
    %v2067 = vadd.f32 %v2035, %v2052
    %v2068 = vadd.f32 %v2036, %v2053
    %v2069 = vadd.f32 %v2037, %v2054
    %v2070 = vadd.f32 %v2038, %v2055
    %v2071 = vadd.f32 %v2039, %v2056
    %v2072 = vadd.f32 %v2040, %v2057
    %v2073 = vadd.f32 %v2041, %v2050
    %v2074 = vld [vmem:[%s3 + $0x6] sm:$0x1]
    %v2075 = vperm.slane %v2074, 0
    %v2076 = vadd.f32 %v2058, %v2075
    %v2077 = vadd.f32 %v2059, %v2075
    %v2078 = vadd.f32 %v2060, %v2075
    %v2079 = vadd.f32 %v2061, %v2075
    %v2080 = vadd.f32 %v2062, %v2075
    %v2081 = vadd.f32 %v2063, %v2075
    %v2082 = vadd.f32 %v2064, %v2075
    %v2083 = vadd.f32 %v2065, %v2075
    %v2084 = vadd.f32 %v2066, %v2075
    %v2085 = vadd.f32 %v2067, %v2075
    %v2086 = vadd.f32 %v2068, %v2075
    %v2087 = vadd.f32 %v2069, %v2075
    %v2088 = vadd.f32 %v2070, %v2075
    %v2089 = vadd.f32 %v2071, %v2075
    %v2090 = vadd.f32 %v2072, %v2075
    %v2091 = vadd.f32 %v2073, %v2075
    %v2092 = vsub.f32 0.0, %v2076
    %v2093 = vsub.f32 0.0, %v2077
    %v2094 = vsub.f32 0.0, %v2078
    %v2095 = vsub.f32 0.0, %v2079
    %v2096 = vsub.f32 0.0, %v2080
    %v2097 = vsub.f32 0.0, %v2081
    %v2098 = vsub.f32 0.0, %v2082
    %v2099 = vsub.f32 0.0, %v2083
    %v2100 = vsub.f32 0.0, %v2084
    %v2101 = vsub.f32 0.0, %v2085
    %v2102 = vsub.f32 0.0, %v2086
    %v2103 = vsub.f32 0.0, %v2087
    %v2104 = vsub.f32 0.0, %v2088
    %v2105 = vsub.f32 0.0, %v2089
    %v2106 = vsub.f32 0.0, %v2090
    %v2107 = vsub.f32 0.0, %v2091
    %v2108 = vmul.f32 %v2092, 1.442695
    %v2109 = vpow.pop %v2108
    %v2110 = vmul.f32 %v2093, 1.442695
    %v2111 = vpow.pop %v2110
    %v2112 = vmul.f32 %v2094, 1.442695
    %v2113 = vpow.pop %v2112
    %v2114 = vmul.f32 %v2095, 1.442695
    %v2115 = vpow.pop %v2114
    %v2116 = vmul.f32 %v2096, 1.442695
    %v2117 = vpow.pop %v2116
    %v2118 = vmul.f32 %v2097, 1.442695
    %v2119 = vpow.pop %v2118
    %v2120 = vmul.f32 %v2098, 1.442695
    %v2121 = vpow.pop %v2120
    %v2122 = vmul.f32 %v2099, 1.442695
    %v2123 = vpow.pop %v2122
    %v2124 = vmul.f32 %v2100, 1.442695
    %v2125 = vpow.pop %v2124
    %v2126 = vmul.f32 %v2101, 1.442695
    %v2127 = vpow.pop %v2126
    %v2128 = vmul.f32 %v2102, 1.442695
    %v2129 = vpow.pop %v2128
    %v2130 = vmul.f32 %v2103, 1.442695
    %v2131 = vpow.pop %v2130
    %v2132 = vmul.f32 %v2104, 1.442695
    %v2133 = vpow.pop %v2132
    %v2134 = vmul.f32 %v2105, 1.442695
    %v2135 = vpow.pop %v2134
    %v2136 = vmul.f32 %v2106, 1.442695
    %v2137 = vpow.pop %v2136
    %v2138 = vmul.f32 %v2107, 1.442695
    %v2139 = vpow.pop %v2138
    %v2140 = vadd.f32 %v2109, 1.0
    %v2141 = vadd.f32 %v2111, 1.0
    %v2142 = vadd.f32 %v2113, 1.0
    %v2143 = vadd.f32 %v2115, 1.0
    %v2144 = vadd.f32 %v2117, 1.0
    %v2145 = vadd.f32 %v2119, 1.0
    %v2146 = vadd.f32 %v2121, 1.0
    %v2147 = vadd.f32 %v2123, 1.0
    %v2148 = vadd.f32 %v2125, 1.0
    %v2149 = vadd.f32 %v2127, 1.0
    %v2150 = vadd.f32 %v2129, 1.0
    %v2151 = vadd.f32 %v2131, 1.0
    %v2152 = vadd.f32 %v2133, 1.0
    %v2153 = vadd.f32 %v2135, 1.0
    %v2154 = vadd.f32 %v2137, 1.0
    %v2155 = vadd.f32 %v2139, 1.0
    %v2156 = vrcp.pop %v2140
    %v2157 = vrcp.pop %v2141
    %v2158 = vrcp.pop %v2142
    %v2159 = vrcp.pop %v2143
    %v2160 = vrcp.pop %v2144
    %v2161 = vrcp.pop %v2145
    %v2162 = vrcp.pop %v2146
    %v2163 = vrcp.pop %v2147
    %v2164 = vrcp.pop %v2148
    %v2165 = vrcp.pop %v2149
    %v2166 = vrcp.pop %v2150
    %v2167 = vrcp.pop %v2151
    %v2168 = vrcp.pop %v2152
    %v2169 = vrcp.pop %v2153
    %v2170 = vrcp.pop %v2154
    %v2171 = vrcp.pop %v2155
    %v2172 = vmul.f32 %v2076, %v2156
    %v2173 = vmul.f32 %v2077, %v2157
    %v2174 = vmul.f32 %v2078, %v2158
    %v2175 = vmul.f32 %v2079, %v2159
    %v2176 = vmul.f32 %v2080, %v2160
    %v2177 = vmul.f32 %v2081, %v2161
    %v2178 = vmul.f32 %v2082, %v2162
    %v2179 = vmul.f32 %v2083, %v2163
    %v2180 = vmul.f32 %v2084, %v2164
    %v2181 = vmul.f32 %v2085, %v2165
    %v2182 = vmul.f32 %v2086, %v2166
    %v2183 = vmul.f32 %v2087, %v2167
    %v2184 = vmul.f32 %v2088, %v2168
    %v2185 = vmul.f32 %v2089, %v2169
    %v2186 = vmul.f32 %v2090, %v2170
    %v2187 = vmul.f32 %v2091, %v2171
    %v2188 = vlaneseq
    %v2189 = vshrl.u32 %v2188, 7
    %vm2190 = vcmp.lt.s32.totalorder %v2189, 0
    %v2191 = vsub.s32 0, %v2189
    %v2192 = vsel %vm2190, %v2191, %v2189
    %v2193 = vshrl.u32 %v2192, 1
    %v2194 = vand.u32 %v2192, 1
    %v2195 = vsub.s32 0, %v2194
    %v2196 = vsel %vm2190, %v2195, %v2194
    %vm2197 = vcmp.ne.s32.totalorder %v2196, 0
    %vm2198 = vcmp.lt.s32.totalorder %v2196, 0
    %vm2199 = vmand %vm2198, %vm2197
    %v2200 = vadd.s32 %v2196, 2
    %v2201 = vsel %vm2199, %v2200, %v2196
    %vm2202 = vcmp.eq.s32.totalorder %v2201, 1
    %vm2203 = vmand 0, %vm2202
    %vm2204 = vmand 1, %vm2202
    %v2205 = vsel %vm2203, %v2172, 0.0
    %v2206 = vsel %vm2204, %v2173, 0.0
    %v2207 = vsel %vm2203, %v2174, 0.0
    %v2208 = vsel %vm2204, %v2175, 0.0
    %v2209 = vsel %vm2203, %v2176, 0.0
    %v2210 = vsel %vm2204, %v2177, 0.0
    %v2211 = vsel %vm2203, %v2178, 0.0
    %v2212 = vsel %vm2204, %v2179, 0.0
    %v2213 = vsel %vm2203, %v2180, 0.0
    %v2214 = vsel %vm2204, %v2181, 0.0
    %v2215 = vsel %vm2203, %v2182, 0.0
    %v2216 = vsel %vm2204, %v2183, 0.0
    %v2217 = vsel %vm2203, %v2184, 0.0
    %v2218 = vsel %vm2204, %v2185, 0.0
    %v2219 = vsel %vm2203, %v2186, 0.0
    %v2220 = vsel %vm2204, %v2187, 0.0
    %v2221 = vadd.f32 %v2205, %v2206
    %v2222 = vadd.f32 %v2221, %v2207
    %v2223 = vadd.f32 %v2222, %v2208
    %v2224 = vadd.f32 %v2223, %v2209
    %v2225 = vadd.f32 %v2224, %v2210
    %v2226 = vadd.f32 %v2225, %v2211
    %v2227 = vadd.f32 %v2226, %v2212
    %v2228 = vrot.slane %v2227, 4
    %v2229 = vadd.f32 %v2227, %v2228
    %v2230 = vrot.slane %v2229, 2
    %v2231 = vadd.f32 %v2229, %v2230
    %v2232 = vrot.slane %v2231, 1
    %v2233 = vadd.f32 %v2231, %v2232
    %v2234 = vadd.f32 %v2213, %v2214
    %v2235 = vadd.f32 %v2234, %v2215
    %v2236 = vadd.f32 %v2235, %v2216
    %v2237 = vadd.f32 %v2236, %v2217
    %v2238 = vadd.f32 %v2237, %v2218
    %v2239 = vadd.f32 %v2238, %v2219
    %v2240 = vadd.f32 %v2239, %v2220
    %v2241 = vrot.slane %v2240, 4
    %v2242 = vadd.f32 %v2240, %v2241
    %v2243 = vrot.slane %v2242, 2
    %v2244 = vadd.f32 %v2242, %v2243
    %v2245 = vrot.slane %v2244, 1
    %v2246 = vadd.f32 %v2244, %v2245
    %v2247 = vmul.f32 %v2233, 0.0625
    %v2248 = vmul.f32 %v2246, 0.0625
    %v2249 = vpack.c.bf16 %v2247, %v2247
    %v2250 = vpack.c.bf16 %v2248, %v2248
    %s2251 = scalar_lea.vmem %s1, 320
    %v2252 = vld [vmem:[%s2251] sm:$0xf]
    %v2253 = vld [vmem:[%s2251 + $0x4] sm:$0xf]
    %v2254 = vld [vmem:[%s2251 + $0x8] sm:$0xf]
    %v2255 = vld [vmem:[%s2251 + $0xc] sm:$0xf]
    %v2256 = vld [vmem:[%s2251 + $0x10] sm:$0xf]
    %v2257 = vld [vmem:[%s2251 + $0x14] sm:$0xf]
    %v2258 = vld [vmem:[%s2251 + $0x18] sm:$0xf]
    %v2259 = vld [vmem:[%s2251 + $0x1c] sm:$0xf]
    %v2260 = vld [vmem:[%s2251 + $0x20] sm:$0xf]
    %v2261 = vld [vmem:[%s2251 + $0x24] sm:$0xf]
    %v2262 = vld [vmem:[%s2251 + $0x28] sm:$0xf]
    %v2263 = vld [vmem:[%s2251 + $0x2c] sm:$0xf]
    %v2264 = vld [vmem:[%s2251 + $0x30] sm:$0xf]
    %v2265 = vld [vmem:[%s2251 + $0x34] sm:$0xf]
    %v2266 = vld [vmem:[%s2251 + $0x38] sm:$0xf]
    %v2267 = vld [vmem:[%s2251 + $0x3c] sm:$0xf]
    %v2268 = vld [vmem:[%s3 + $0x7] sm:$0x1]
    %v2269 = vperm.slane %v2268, 0
    %v2272 = vunpack.c.l.b16 %v2249
    %v2273 = vunpack.c.l.b16 %v2250
    %v2274 = vsel %vm1002, %v2273, %v2272
    %v2275 = vpack.c.b16 %v2274, %v2274
    %v2293 = vunpack.c.l.b16 %v2252
    %v2294 = vunpack.c.l.b16 %v2253
    %v2295 = vunpack.c.l.b16 %v2254
    %v2296 = vunpack.c.l.b16 %v2255
    %v2297 = vunpack.c.l.b16 %v2256
    %v2298 = vunpack.c.l.b16 %v2257
    %v2299 = vunpack.c.l.b16 %v2258
    %v2300 = vunpack.c.l.b16 %v2259
    %v2301 = vunpack.c.l.b16 %v2260
    %v2302 = vunpack.c.l.b16 %v2261
    %v2303 = vunpack.c.l.b16 %v2262
    %v2304 = vunpack.c.l.b16 %v2263
    %v2305 = vunpack.c.l.b16 %v2264
    %v2306 = vunpack.c.l.b16 %v2265
    %v2307 = vunpack.c.l.b16 %v2266
    %v2308 = vunpack.c.l.b16 %v2267
    %v2309 = vpack.c.b16 %v2294, %v2293
    %v2310 = vpack.c.b16 %v2296, %v2295
    %v2311 = vpack.c.b16 %v2298, %v2297
    %v2312 = vpack.c.b16 %v2300, %v2299
    %v2313 = vpack.c.b16 %v2302, %v2301
    %v2314 = vpack.c.b16 %v2304, %v2303
    %v2315 = vpack.c.b16 %v2306, %v2305
    %v2316 = vpack.c.b16 %v2308, %v2307
    %2325 = vmatpush.bf16.msra.mxu0 %v2316
    %2326 = vmatpush.bf16.msra.mxu0 %v2315
    %2327 = vmatpush.bf16.msra.mxu0 %v2314
    %2328 = vmatpush.bf16.msra.mxu0 %v2313
    %2329 = vmatpush.bf16.msra.mxu0 %v2312
    %2330 = vmatpush.bf16.msra.mxu0 %v2311
    %2331 = vmatpush.bf16.msra.mxu0 %v2310
    %2332 = vmatpush.bf16.msra.mxu0 %v2309
    %2333 = vmatmul.bf16.gmra.mxu0 %v2275
    %v2334 = vpop.f32.mrf.mxu0
    %v2335 = vadd.f32 %v2269, %v2334
    %v2336 = vpop.f32.mrf.mxu0
    %2337 = vdwg.mxu0
    %v2338 = vsub.f32 0.0, %v2335
    %v2339 = vmul.f32 %v2338, 1.442695
    %v2340 = vpow.pop %v2339
    %v2341 = vadd.f32 %v2340, 1.0
    %v2342 = vrcp.pop %v2341
    %v2343 = vmul.f32 %v2335, %v2342
    %v2344 = vpack.c.bf16 %v2343, %v2343
    %s2345 = scalar_lea.vmem %s1, 384
    %v2346 = vld [vmem:[%s2345] sm:$0xf]
    %v2347 = vld [vmem:[%s2345 + $0x4] sm:$0xf]
    %v2348 = vld [vmem:[%s2345 + $0x8] sm:$0xf]
    %v2349 = vld [vmem:[%s2345 + $0xc] sm:$0xf]
    %v2350 = vld [vmem:[%s2345 + $0x10] sm:$0xf]
    %v2351 = vld [vmem:[%s2345 + $0x14] sm:$0xf]
    %v2352 = vld [vmem:[%s2345 + $0x18] sm:$0xf]
    %v2353 = vld [vmem:[%s2345 + $0x1c] sm:$0xf]
    %v2354 = vld [vmem:[%s2345 + $0x20] sm:$0xf]
    %v2355 = vld [vmem:[%s2345 + $0x24] sm:$0xf]
    %v2356 = vld [vmem:[%s2345 + $0x28] sm:$0xf]
    %v2357 = vld [vmem:[%s2345 + $0x2c] sm:$0xf]
    %v2358 = vld [vmem:[%s2345 + $0x30] sm:$0xf]
    %v2359 = vld [vmem:[%s2345 + $0x34] sm:$0xf]
    %v2360 = vld [vmem:[%s2345 + $0x38] sm:$0xf]
    %v2361 = vld [vmem:[%s2345 + $0x3c] sm:$0xf]
    %v2362 = vld [vmem:[%s3 + $0x8] sm:$0x1]
    %v2363 = vperm.slane %v2362, 0
    %v2380 = vunpack.c.l.b16 %v2346
    %v2381 = vunpack.c.l.b16 %v2347
    %v2382 = vunpack.c.l.b16 %v2348
    %v2383 = vunpack.c.l.b16 %v2349
    %v2384 = vunpack.c.l.b16 %v2350
    %v2385 = vunpack.c.l.b16 %v2351
    %v2386 = vunpack.c.l.b16 %v2352
    %v2387 = vunpack.c.l.b16 %v2353
    %v2388 = vunpack.c.l.b16 %v2354
    %v2389 = vunpack.c.l.b16 %v2355
    %v2390 = vunpack.c.l.b16 %v2356
    %v2391 = vunpack.c.l.b16 %v2357
    %v2392 = vunpack.c.l.b16 %v2358
    %v2393 = vunpack.c.l.b16 %v2359
    %v2394 = vunpack.c.l.b16 %v2360
    %v2395 = vunpack.c.l.b16 %v2361
    %v2396 = vpack.c.b16 %v2381, %v2380
    %v2397 = vpack.c.b16 %v2383, %v2382
    %v2398 = vpack.c.b16 %v2385, %v2384
    %v2399 = vpack.c.b16 %v2387, %v2386
    %v2400 = vpack.c.b16 %v2389, %v2388
    %v2401 = vpack.c.b16 %v2391, %v2390
    %v2402 = vpack.c.b16 %v2393, %v2392
    %v2403 = vpack.c.b16 %v2395, %v2394
    %2412 = vmatpush.bf16.msra.mxu0 %v2403
    %2413 = vmatpush.bf16.msra.mxu0 %v2402
    %2414 = vmatpush.bf16.msra.mxu0 %v2401
    %2415 = vmatpush.bf16.msra.mxu0 %v2400
    %2416 = vmatpush.bf16.msra.mxu0 %v2399
    %2417 = vmatpush.bf16.msra.mxu0 %v2398
    %2418 = vmatpush.bf16.msra.mxu0 %v2397
    %2419 = vmatpush.bf16.msra.mxu0 %v2396
    %2420 = vmatmul.bf16.gmra.mxu0 %v2344
    %v2421 = vpop.f32.mrf.mxu0
    %v2422 = vadd.f32 %v2363, %v2421
    %v2423 = vpop.f32.mrf.mxu0
    %2424 = vdwg.mxu0
    %v2425 = vsub.f32 0.0, %v2422
    %v2426 = vmul.f32 %v2425, 1.442695
    %v2427 = vpow.pop %v2426
    %v2428 = vadd.f32 %v2427, 1.0
    %v2429 = vrcp.pop %v2428
    %v2431 = vrot.slane %v2429, 1
    %v2432 = vperm.slane %v2429, 0
    %v2433 = vperm.slane %v2431, 0
    %v2436 = vmul.f32 %v2205, %v2432
    %v2437 = vmul.f32 %v2206, %v2432
    %v2438 = vmul.f32 %v2207, %v2432
    %v2439 = vmul.f32 %v2208, %v2432
    %v2440 = vmul.f32 %v2209, %v2432
    %v2441 = vmul.f32 %v2210, %v2432
    %v2442 = vmul.f32 %v2211, %v2432
    %v2443 = vmul.f32 %v2212, %v2432
    %v2444 = vmul.f32 %v2213, %v2433
    %v2445 = vmul.f32 %v2214, %v2433
    %v2446 = vmul.f32 %v2215, %v2433
    %v2447 = vmul.f32 %v2216, %v2433
    %v2448 = vmul.f32 %v2217, %v2433
    %v2449 = vmul.f32 %v2218, %v2433
    %v2450 = vmul.f32 %v2219, %v2433
    %v2451 = vmul.f32 %v2220, %v2433
    %v2452 = vpack.c.bf16 %v2437, %v2436
    %v2453 = vpack.c.bf16 %v2439, %v2438
    %v2454 = vpack.c.bf16 %v2441, %v2440
    %v2455 = vpack.c.bf16 %v2443, %v2442
    %v2456 = vpack.c.bf16 %v2445, %v2444
    %v2457 = vpack.c.bf16 %v2447, %v2446
    %v2458 = vpack.c.bf16 %v2449, %v2448
    %v2459 = vpack.c.bf16 %v2451, %v2450
    %s2460 = scalar_lea.vmem %s1, 448
    %v2461 = vld [vmem:[%s2460] sm:$0xf]
    %v2462 = vld [vmem:[%s2460 + $0x4] sm:$0xf]
    %v2463 = vld [vmem:[%s2460 + $0x8] sm:$0xf]
    %v2464 = vld [vmem:[%s2460 + $0xc] sm:$0xf]
    %v2465 = vld [vmem:[%s2460 + $0x10] sm:$0xf]
    %v2466 = vld [vmem:[%s2460 + $0x14] sm:$0xf]
    %v2467 = vld [vmem:[%s2460 + $0x18] sm:$0xf]
    %v2468 = vld [vmem:[%s2460 + $0x1c] sm:$0xf]
    %v2469 = vld [vmem:[%s2460 + $0x20] sm:$0xf]
    %v2470 = vld [vmem:[%s2460 + $0x24] sm:$0xf]
    %v2471 = vld [vmem:[%s2460 + $0x28] sm:$0xf]
    %v2472 = vld [vmem:[%s2460 + $0x2c] sm:$0xf]
    %v2473 = vld [vmem:[%s2460 + $0x30] sm:$0xf]
    %v2474 = vld [vmem:[%s2460 + $0x34] sm:$0xf]
    %v2475 = vld [vmem:[%s2460 + $0x38] sm:$0xf]
    %v2476 = vld [vmem:[%s2460 + $0x3c] sm:$0xf]
    %v2477 = vld [vmem:[%s3 + $0x9] sm:$0x1]
    %v2478 = vperm.slane %v2477, 0
    %v2495 = vunpack.c.l.b16 %v2461
    %v2496 = vunpack.c.l.b16 %v2462
    %v2497 = vunpack.c.l.b16 %v2463
    %v2498 = vunpack.c.l.b16 %v2464
    %v2499 = vunpack.c.l.b16 %v2465
    %v2500 = vunpack.c.l.b16 %v2466
    %v2501 = vunpack.c.l.b16 %v2467
    %v2502 = vunpack.c.l.b16 %v2468
    %v2503 = vunpack.c.l.b16 %v2469
    %v2504 = vunpack.c.l.b16 %v2470
    %v2505 = vunpack.c.l.b16 %v2471
    %v2506 = vunpack.c.l.b16 %v2472
    %v2507 = vunpack.c.l.b16 %v2473
    %v2508 = vunpack.c.l.b16 %v2474
    %v2509 = vunpack.c.l.b16 %v2475
    %v2510 = vunpack.c.l.b16 %v2476
    %v2511 = vpack.c.b16 %v2496, %v2495
    %v2512 = vpack.c.b16 %v2498, %v2497
    %v2513 = vpack.c.b16 %v2500, %v2499
    %v2514 = vpack.c.b16 %v2502, %v2501
    %v2515 = vpack.c.b16 %v2504, %v2503
    %v2516 = vpack.c.b16 %v2506, %v2505
    %v2517 = vpack.c.b16 %v2508, %v2507
    %v2518 = vpack.c.b16 %v2510, %v2509
    %2527 = vmatpush.bf16.msra.mxu0 %v2518
    %2528 = vmatpush.bf16.msra.mxu0 %v2517
    %2529 = vmatpush.bf16.msra.mxu0 %v2516
    %2530 = vmatpush.bf16.msra.mxu0 %v2515
    %2531 = vmatpush.bf16.msra.mxu0 %v2514
    %2532 = vmatpush.bf16.msra.mxu0 %v2513
    %2533 = vmatpush.bf16.msra.mxu0 %v2512
    %2534 = vmatpush.bf16.msra.mxu0 %v2511
    %2535 = vmatmul.bf16.gmra.mxu0 %v2452
    %v2536 = vpop.f32.mrf.mxu0
    %v2537 = vadd.f32 %v2478, %v2536
    %v2538 = vpop.f32.mrf.mxu0
    %v2539 = vadd.f32 %v2478, %v2538
    %2540 = vmatmul.bf16.gmra.mxu0 %v2453
    %v2541 = vpop.f32.mrf.mxu0
    %v2542 = vadd.f32 %v2478, %v2541
    %v2543 = vpop.f32.mrf.mxu0
    %v2544 = vadd.f32 %v2478, %v2543
    %2545 = vmatmul.bf16.gmra.mxu0 %v2454
    %v2546 = vpop.f32.mrf.mxu0
    %v2547 = vadd.f32 %v2478, %v2546
    %v2548 = vpop.f32.mrf.mxu0
    %v2549 = vadd.f32 %v2478, %v2548
    %2550 = vmatmul.bf16.gmra.mxu0 %v2455
    %v2551 = vpop.f32.mrf.mxu0
    %v2552 = vadd.f32 %v2478, %v2551
    %v2553 = vpop.f32.mrf.mxu0
    %v2554 = vadd.f32 %v2478, %v2553
    %2555 = vmatmul.bf16.gmra.mxu0 %v2456
    %v2556 = vpop.f32.mrf.mxu0
    %v2557 = vadd.f32 %v2478, %v2556
    %v2558 = vpop.f32.mrf.mxu0
    %v2559 = vadd.f32 %v2478, %v2558
    %2560 = vmatmul.bf16.gmra.mxu0 %v2457
    %v2561 = vpop.f32.mrf.mxu0
    %v2562 = vadd.f32 %v2478, %v2561
    %v2563 = vpop.f32.mrf.mxu0
    %v2564 = vadd.f32 %v2478, %v2563
    %2565 = vmatmul.bf16.gmra.mxu0 %v2458
    %v2566 = vpop.f32.mrf.mxu0
    %v2567 = vadd.f32 %v2478, %v2566
    %v2568 = vpop.f32.mrf.mxu0
    %v2569 = vadd.f32 %v2478, %v2568
    %2570 = vmatmul.bf16.gmra.mxu0 %v2459
    %v2571 = vpop.f32.mrf.mxu0
    %v2572 = vadd.f32 %v2478, %v2571
    %v2573 = vpop.f32.mrf.mxu0
    %v2574 = vadd.f32 %v2478, %v2573
    %2575 = vdwg.mxu0
    %v2576 = vpack.c.bf16 %v2539, %v2537
    %v2577 = vpack.c.bf16 %v2544, %v2542
    %v2578 = vpack.c.bf16 %v2549, %v2547
    %v2579 = vpack.c.bf16 %v2554, %v2552
    %v2580 = vpack.c.bf16 %v2559, %v2557
    %v2581 = vpack.c.bf16 %v2564, %v2562
    %v2582 = vpack.c.bf16 %v2569, %v2567
    %v2583 = vpack.c.bf16 %v2574, %v2572
    %s2584 = scalar_lea.vmem %s1, 512
    %v2585 = vld [vmem:[%s2584] sm:$0xf]
    %v2586 = vld [vmem:[%s2584 + $0x4] sm:$0xf]
    %v2587 = vld [vmem:[%s2584 + $0x8] sm:$0xf]
    %v2588 = vld [vmem:[%s2584 + $0xc] sm:$0xf]
    %v2589 = vld [vmem:[%s2584 + $0x10] sm:$0xf]
    %v2590 = vld [vmem:[%s2584 + $0x14] sm:$0xf]
    %v2591 = vld [vmem:[%s2584 + $0x18] sm:$0xf]
    %v2592 = vld [vmem:[%s2584 + $0x1c] sm:$0xf]
    %v2593 = vld [vmem:[%s2584 + $0x20] sm:$0xf]
    %v2594 = vld [vmem:[%s2584 + $0x24] sm:$0xf]
    %v2595 = vld [vmem:[%s2584 + $0x28] sm:$0xf]
    %v2596 = vld [vmem:[%s2584 + $0x2c] sm:$0xf]
    %v2597 = vld [vmem:[%s2584 + $0x30] sm:$0xf]
    %v2598 = vld [vmem:[%s2584 + $0x34] sm:$0xf]
    %v2599 = vld [vmem:[%s2584 + $0x38] sm:$0xf]
    %v2600 = vld [vmem:[%s2584 + $0x3c] sm:$0xf]
    %v2601 = vld [vmem:[%s3 + $0xa] sm:$0x1]
    %v2602 = vperm.slane %v2601, 0
    %v2619 = vunpack.c.l.b16 %v2585
    %v2620 = vunpack.c.l.b16 %v2586
    %v2621 = vunpack.c.l.b16 %v2587
    %v2622 = vunpack.c.l.b16 %v2588
    %v2623 = vunpack.c.l.b16 %v2589
    %v2624 = vunpack.c.l.b16 %v2590
    %v2625 = vunpack.c.l.b16 %v2591
    %v2626 = vunpack.c.l.b16 %v2592
    %v2627 = vunpack.c.l.b16 %v2593
    %v2628 = vunpack.c.l.b16 %v2594
    %v2629 = vunpack.c.l.b16 %v2595
    %v2630 = vunpack.c.l.b16 %v2596
    %v2631 = vunpack.c.l.b16 %v2597
    %v2632 = vunpack.c.l.b16 %v2598
    %v2633 = vunpack.c.l.b16 %v2599
    %v2634 = vunpack.c.l.b16 %v2600
    %v2635 = vpack.c.b16 %v2620, %v2619
    %v2636 = vpack.c.b16 %v2622, %v2621
    %v2637 = vpack.c.b16 %v2624, %v2623
    %v2638 = vpack.c.b16 %v2626, %v2625
    %v2639 = vpack.c.b16 %v2628, %v2627
    %v2640 = vpack.c.b16 %v2630, %v2629
    %v2641 = vpack.c.b16 %v2632, %v2631
    %v2642 = vpack.c.b16 %v2634, %v2633
    %2651 = vmatpush.bf16.msra.mxu0 %v2642
    %2652 = vmatpush.bf16.msra.mxu0 %v2641
    %2653 = vmatpush.bf16.msra.mxu0 %v2640
    %2654 = vmatpush.bf16.msra.mxu0 %v2639
    %2655 = vmatpush.bf16.msra.mxu0 %v2638
    %2656 = vmatpush.bf16.msra.mxu0 %v2637
    %2657 = vmatpush.bf16.msra.mxu0 %v2636
    %2658 = vmatpush.bf16.msra.mxu0 %v2635
    %2659 = vmatmul.bf16.gmra.mxu0 %v2576
    %v2660 = vpop.f32.mrf.mxu0
    %v2661 = vadd.f32 %v2602, %v2660
    %v2662 = vpop.f32.mrf.mxu0
    %v2663 = vadd.f32 %v2602, %v2662
    %2664 = vmatmul.bf16.gmra.mxu0 %v2577
    %v2665 = vpop.f32.mrf.mxu0
    %v2666 = vadd.f32 %v2602, %v2665
    %v2667 = vpop.f32.mrf.mxu0
    %v2668 = vadd.f32 %v2602, %v2667
    %2669 = vmatmul.bf16.gmra.mxu0 %v2578
    %v2670 = vpop.f32.mrf.mxu0
    %v2671 = vadd.f32 %v2602, %v2670
    %v2672 = vpop.f32.mrf.mxu0
    %v2673 = vadd.f32 %v2602, %v2672
    %2674 = vmatmul.bf16.gmra.mxu0 %v2579
    %v2675 = vpop.f32.mrf.mxu0
    %v2676 = vadd.f32 %v2602, %v2675
    %v2677 = vpop.f32.mrf.mxu0
    %v2678 = vadd.f32 %v2602, %v2677
    %2679 = vmatmul.bf16.gmra.mxu0 %v2580
    %v2680 = vpop.f32.mrf.mxu0
    %v2681 = vadd.f32 %v2602, %v2680
    %v2682 = vpop.f32.mrf.mxu0
    %v2683 = vadd.f32 %v2602, %v2682
    %2684 = vmatmul.bf16.gmra.mxu0 %v2581
    %v2685 = vpop.f32.mrf.mxu0
    %v2686 = vadd.f32 %v2602, %v2685
    %v2687 = vpop.f32.mrf.mxu0
    %v2688 = vadd.f32 %v2602, %v2687
    %2689 = vmatmul.bf16.gmra.mxu0 %v2582
    %v2690 = vpop.f32.mrf.mxu0
    %v2691 = vadd.f32 %v2602, %v2690
    %v2692 = vpop.f32.mrf.mxu0
    %v2693 = vadd.f32 %v2602, %v2692
    %2694 = vmatmul.bf16.gmra.mxu0 %v2583
    %v2695 = vpop.f32.mrf.mxu0
    %v2696 = vadd.f32 %v2602, %v2695
    %v2697 = vpop.f32.mrf.mxu0
    %v2698 = vadd.f32 %v2602, %v2697
    %2699 = vdwg.mxu0
    %v2700 = vsub.f32 0.0, %v2661
    %v2701 = vsub.f32 0.0, %v2663
    %v2702 = vsub.f32 0.0, %v2666
    %v2703 = vsub.f32 0.0, %v2668
    %v2704 = vsub.f32 0.0, %v2671
    %v2705 = vsub.f32 0.0, %v2673
    %v2706 = vsub.f32 0.0, %v2676
    %v2707 = vsub.f32 0.0, %v2678
    %v2708 = vsub.f32 0.0, %v2681
    %v2709 = vsub.f32 0.0, %v2683
    %v2710 = vsub.f32 0.0, %v2686
    %v2711 = vsub.f32 0.0, %v2688
    %v2712 = vsub.f32 0.0, %v2691
    %v2713 = vsub.f32 0.0, %v2693
    %v2714 = vsub.f32 0.0, %v2696
    %v2715 = vsub.f32 0.0, %v2698
    %v2716 = vmul.f32 %v2700, 1.442695
    %v2717 = vpow.pop %v2716
    %v2718 = vmul.f32 %v2701, 1.442695
    %v2719 = vpow.pop %v2718
    %v2720 = vmul.f32 %v2702, 1.442695
    %v2721 = vpow.pop %v2720
    %v2722 = vmul.f32 %v2703, 1.442695
    %v2723 = vpow.pop %v2722
    %v2724 = vmul.f32 %v2704, 1.442695
    %v2725 = vpow.pop %v2724
    %v2726 = vmul.f32 %v2705, 1.442695
    %v2727 = vpow.pop %v2726
    %v2728 = vmul.f32 %v2706, 1.442695
    %v2729 = vpow.pop %v2728
    %v2730 = vmul.f32 %v2707, 1.442695
    %v2731 = vpow.pop %v2730
    %v2732 = vmul.f32 %v2708, 1.442695
    %v2733 = vpow.pop %v2732
    %v2734 = vmul.f32 %v2709, 1.442695
    %v2735 = vpow.pop %v2734
    %v2736 = vmul.f32 %v2710, 1.442695
    %v2737 = vpow.pop %v2736
    %v2738 = vmul.f32 %v2711, 1.442695
    %v2739 = vpow.pop %v2738
    %v2740 = vmul.f32 %v2712, 1.442695
    %v2741 = vpow.pop %v2740
    %v2742 = vmul.f32 %v2713, 1.442695
    %v2743 = vpow.pop %v2742
    %v2744 = vmul.f32 %v2714, 1.442695
    %v2745 = vpow.pop %v2744
    %v2746 = vmul.f32 %v2715, 1.442695
    %v2747 = vpow.pop %v2746
    %v2748 = vadd.f32 %v2717, 1.0
    %v2749 = vadd.f32 %v2719, 1.0
    %v2750 = vadd.f32 %v2721, 1.0
    %v2751 = vadd.f32 %v2723, 1.0
    %v2752 = vadd.f32 %v2725, 1.0
    %v2753 = vadd.f32 %v2727, 1.0
    %v2754 = vadd.f32 %v2729, 1.0
    %v2755 = vadd.f32 %v2731, 1.0
    %v2756 = vadd.f32 %v2733, 1.0
    %v2757 = vadd.f32 %v2735, 1.0
    %v2758 = vadd.f32 %v2737, 1.0
    %v2759 = vadd.f32 %v2739, 1.0
    %v2760 = vadd.f32 %v2741, 1.0
    %v2761 = vadd.f32 %v2743, 1.0
    %v2762 = vadd.f32 %v2745, 1.0
    %v2763 = vadd.f32 %v2747, 1.0
    %v2764 = vrcp.pop %v2748
    %v2765 = vrcp.pop %v2749
    %v2766 = vrcp.pop %v2750
    %v2767 = vrcp.pop %v2751
    %v2768 = vrcp.pop %v2752
    %v2769 = vrcp.pop %v2753
    %v2770 = vrcp.pop %v2754
    %v2771 = vrcp.pop %v2755
    %v2772 = vrcp.pop %v2756
    %v2773 = vrcp.pop %v2757
    %v2774 = vrcp.pop %v2758
    %v2775 = vrcp.pop %v2759
    %v2776 = vrcp.pop %v2760
    %v2777 = vrcp.pop %v2761
    %v2778 = vrcp.pop %v2762
    %v2779 = vrcp.pop %v2763
    %v2780 = vmul.f32 %v2661, %v2764
    %v2781 = vmul.f32 %v2663, %v2765
    %v2782 = vmul.f32 %v2666, %v2766
    %v2783 = vmul.f32 %v2668, %v2767
    %v2784 = vmul.f32 %v2671, %v2768
    %v2785 = vmul.f32 %v2673, %v2769
    %v2786 = vmul.f32 %v2676, %v2770
    %v2787 = vmul.f32 %v2678, %v2771
    %v2788 = vmul.f32 %v2681, %v2772
    %v2789 = vmul.f32 %v2683, %v2773
    %v2790 = vmul.f32 %v2686, %v2774
    %v2791 = vmul.f32 %v2688, %v2775
    %v2792 = vmul.f32 %v2691, %v2776
    %v2793 = vmul.f32 %v2693, %v2777
    %v2794 = vmul.f32 %v2696, %v2778
    %v2795 = vmul.f32 %v2698, %v2779
    %v2796 = vsel %vm2203, %v2780, 0.0
    %v2797 = vsel %vm2204, %v2781, 0.0
    %v2798 = vsel %vm2203, %v2782, 0.0
    %v2799 = vsel %vm2204, %v2783, 0.0
    %v2800 = vsel %vm2203, %v2784, 0.0
    %v2801 = vsel %vm2204, %v2785, 0.0
    %v2802 = vsel %vm2203, %v2786, 0.0
    %v2803 = vsel %vm2204, %v2787, 0.0
    %v2804 = vsel %vm2203, %v2788, 0.0
    %v2805 = vsel %vm2204, %v2789, 0.0
    %v2806 = vsel %vm2203, %v2790, 0.0
    %v2807 = vsel %vm2204, %v2791, 0.0
    %v2808 = vsel %vm2203, %v2792, 0.0
    %v2809 = vsel %vm2204, %v2793, 0.0
    %v2810 = vsel %vm2203, %v2794, 0.0
    %v2811 = vsel %vm2204, %v2795, 0.0
    %v2812 = vadd.f32 %v2796, %v2797
    %v2813 = vadd.f32 %v2812, %v2798
    %v2814 = vadd.f32 %v2813, %v2799
    %v2815 = vadd.f32 %v2814, %v2800
    %v2816 = vadd.f32 %v2815, %v2801
    %v2817 = vadd.f32 %v2816, %v2802
    %v2818 = vadd.f32 %v2817, %v2803
    %v2819 = vrot.slane %v2818, 4
    %v2820 = vadd.f32 %v2818, %v2819
    %v2821 = vrot.slane %v2820, 2
    %v2822 = vadd.f32 %v2820, %v2821
    %v2823 = vrot.slane %v2822, 1
    %v2824 = vadd.f32 %v2822, %v2823
    %v2825 = vadd.f32 %v2804, %v2805
    %v2826 = vadd.f32 %v2825, %v2806
    %v2827 = vadd.f32 %v2826, %v2807
    %v2828 = vadd.f32 %v2827, %v2808
    %v2829 = vadd.f32 %v2828, %v2809
    %v2830 = vadd.f32 %v2829, %v2810
    %v2831 = vadd.f32 %v2830, %v2811
    %v2832 = vrot.slane %v2831, 4
    %v2833 = vadd.f32 %v2831, %v2832
    %v2834 = vrot.slane %v2833, 2
    %v2835 = vadd.f32 %v2833, %v2834
    %v2836 = vrot.slane %v2835, 1
    %v2837 = vadd.f32 %v2835, %v2836
    %v2838 = vmul.f32 %v2824, 0.0625
    %v2839 = vmul.f32 %v2837, 0.0625
    %v2842 = vsel %vm1002, %v2839, %v2838
    %2844 = vst [vmem:[#allocation2] sm:$0x3] %v2842
    // Predicated region
    $region18: #{efficientnet_forward.1} parent=1 // pred_check
      _
    $region19: #{efficientnet_forward.1} parent=1 // pred_check_branch
      %2846 = sbr.rel (0) target = $region21
    $region20: #{efficientnet_forward.1} parent=1 // pred_region
      %2848 = vsyncadd [#allocation3], 0
      %s2850 = sshll.u32 [#allocation2], 4
      %s2851 = int_to_ptr.vmem [resolvable:$true] %s2850
      %s2852 = sshll.u32 %s4, 4
      %s2853 = int_to_ptr.hbm [resolvable:$true] %s2852
      %2855 = dma.vmem_to_hbm [thread:$0]  %s2851, 32, %s2853, [#allocation3]
    $region21: #{efficientnet_forward.1} parent=1 // pred_fallthru
      _
    // Predicated region
    $region22: #{efficientnet_forward.1} parent=1 // pred_check
      _
    $region23: #{efficientnet_forward.1} parent=1 // pred_check_branch
      %2857 = sbr.rel (0) target = $region25
    $region24: #{efficientnet_forward.1} parent=1 // pred_region
      %2859 = dma.done [#allocation3], 32
    $region25: #{efficientnet_forward.1} parent=1 // pred_fallthru
      _
    %2860 = vsyncpa [#allocation3], 1

</llo_original>
